<compile_context>
chip_gen: v6e
topology: v6e:2x2x1
jax: 0.10.0
libtpu: 0.0.40
codegen_flags: <defaults>
</compile_context>

<pallas_src>
import functools

import jax
import jax.numpy as jnp
from jax import lax
from jax.experimental import pallas as pl
from jax.experimental.pallas import tpu as pltpu


def _deconv_gdn_act_kernel(xc_ref, xp_ref, xn_ref, wp_ref, wl_ref, gamma_ref,
                           beta_ref, alpha_ref, o_ref, buf_ref, *, W, T, activation):
    # xc_ref   : (1, Cin, T)        f32   center row-tile (T = row_tile * W lanes)
    # xp_ref   : (1, Cin, HB)       f32   block just before the tile (prev row = last W lanes)
    # xn_ref   : (1, Cin, HB)       f32   block just after the tile  (next row = first W lanes)
    # wp_ref   : (4, Cout, 2*Cin)   bf16  tap-paired deconv weights (taps 0..7)
    # wl_ref   : (Cout, Cin)        bf16  last tap (tap 8) weight
    # gamma_ref: (Cout, Cout)       bf16  GDN mix (norm = gamma @ x^2 + beta)
    # beta_ref : (Cout, 1)          f32
    # alpha_ref: (1,)               f32   PReLU slope (SMEM scalar)
    # o_ref    : (1, Cout, T)             lane-dense output tile
    # buf_ref  : (Cin, T + 2*(W+1)) bf16  halo'd tile scratch
    Cin = xc_ref.shape[1]
    HB = xp_ref.shape[2]
    P = W + 1                      # halo width on each side of the flattened tile

    j = pl.program_id(1)
    is_first_tile = j == 0
    is_last_tile = j == pl.num_programs(1) - 1

    # ---- assemble the halo'd tile (only the stripes are extra stores; no full zero-fill)
    # layout: [corner(1) | prev row (W) | center tile (T) | next row (W) | corner(1)]
    prev_row = jnp.where(is_first_tile, 0.0, xp_ref[0, :, HB - W:])     # (Cin, W) f32
    next_row = jnp.where(is_last_tile, 0.0, xn_ref[0, :, :W])           # (Cin, W) f32
    zcol = jnp.zeros((Cin, 1), jnp.bfloat16)
    buf_ref[:, 0:1] = zcol
    buf_ref[:, 1:1 + W] = prev_row.astype(jnp.bfloat16)
    buf_ref[:, P:P + T] = xc_ref[0].astype(jnp.bfloat16)                # in-kernel f32->bf16
    buf_ref[:, P + T:P + T + W] = next_row.astype(jnp.bfloat16)
    buf_ref[:, P + T + W:P + T + W + 1] = zcol

    # ---- column wrap masks, computed once at (1, T) and broadcast (hoisted per review)
    col = lax.broadcasted_iota(jnp.int32, (1, T), 1) % W
    not_first_col = col != 0
    not_last_col = col != (W - 1)

    # ---- 9 taps = contiguous lane-offset slices of the halo'd tile + cheap column masks
    taps = []
    for dy in range(3):
        for dx in range(3):
            t = buf_ref[:, dy * W + dx: dy * W + dx + T]                # (Cin, T) bf16
            if dx == 0:
                t = jnp.where(not_first_col, t, jnp.zeros_like(t))
            elif dx == 2:
                t = jnp.where(not_last_col, t, jnp.zeros_like(t))
            taps.append(t)

    # ---- transposed conv as tap-paired accumulating MXU matmuls (f32 accumulation);
    # no (9*Cin, T) patches buffer is ever materialized.
    acc = jnp.dot(wp_ref[0], jnp.concatenate([taps[0], taps[1]], axis=0),
                  preferred_element_type=jnp.float32)
    for p_idx in range(1, 4):
        rhs = jnp.concatenate([taps[2 * p_idx], taps[2 * p_idx + 1]], axis=0)
        acc = acc + jnp.dot(wp_ref[p_idx], rhs, preferred_element_type=jnp.float32)
    acc = acc + jnp.dot(wl_ref[...], taps[8], preferred_element_type=jnp.float32)

    # ---- GDN: y_o = x_o / sqrt(beta_o + sum_j gamma[o, j] * x_j^2)
    # bf16 operands on the MXU for the mix; square / rsqrt / divide stay f32 (v5e-safe).
    norm = beta_ref[...] + jnp.dot(gamma_ref[...], (acc * acc).astype(jnp.bfloat16),
                                   preferred_element_type=jnp.float32)
    # Floor only guards against non-positive norms from unconstrained parameters; a
    # properly reparameterized GDN (beta >= beta_min > 0, gamma >= 0) never triggers it.
    y = acc * lax.rsqrt(jnp.maximum(norm, 1e-9))

    act = activation.lower()
    if act == "prelu":
        a = alpha_ref[0]                         # SMEM scalar read
        y = jnp.where(y > 0, y, a * y)
    elif act == "sigmoid":
        y = jax.nn.sigmoid(y)
    # anything else (incl. 'None'): identity, matching the PyTorch module

    o_ref[0] = y.astype(o_ref.dtype)


def prepare_params(w_t, gamma, beta, alpha):
    """Hoisted parameter preprocessing -- call once, reuse every forward call.

    w_t: ConvTranspose2d weight (Cin, Cout, 3, 3); gamma: (Cout, Cout); beta: (Cout,);
    alpha: scalar PReLU slope.
    """
    Cin, Cout = w_t.shape[0], w_t.shape[1]
    # ConvTranspose2d(k=3, s=1, p=1) == SAME correlation with the spatially flipped kernel:
    #   Wc[a, b, ci, o] = W_t[ci, o, 2 - a, 2 - b]
    w_conv = jnp.transpose(jnp.flip(w_t, axis=(2, 3)), (2, 3, 0, 1))    # (3, 3, Cin, Cout)
    w_taps = jnp.transpose(w_conv.reshape(9, Cin, Cout), (0, 2, 1))     # (9, Cout, Cin)
    # Tap pairing: pair p holds [tap 2p | tap 2p+1] along the contraction axis so each
    # MXU matmul sees K = 2*Cin; tap 8 stays on its own.
    w_pairs = jnp.concatenate([w_taps[0:8:2], w_taps[1:8:2]], axis=2)   # (4, Cout, 2*Cin)
    w_last = w_taps[8]                                                  # (Cout, Cin)
    return (w_pairs.astype(jnp.bfloat16),
            w_last.astype(jnp.bfloat16),
            gamma.astype(jnp.bfloat16),
            beta.reshape(Cout, 1).astype(jnp.float32),
            jnp.asarray(alpha, jnp.float32).reshape(1))


def _choose_row_tile(H, W, target_lanes=1024):
    """Largest row count th dividing H with th*W a multiple of 128 and <= target lanes."""
    cands = [th for th in range(1, H + 1) if H % th == 0 and (th * W) % 128 == 0]
    if not cands:
        return H                       # tiny image: single tile, lane dim = full H*W
    small = [th for th in cands if th * W <= target_lanes]
    return max(small) if small else min(cands)


def _vmem_limit_bytes():
    # Generation-aware scoped-VMEM budget with headroom: ~80 MiB on v5e/v6e (128 MiB
    # physical), ~40 MiB on v7x (64 MiB physical).
    try:
        cap = pltpu.get_tpu_info().vmem_capacity_bytes
    except Exception:
        cap = 128 * 1024 * 1024
    return int(min((5 * cap) // 8, 96 * 1024 * 1024))


@functools.partial(jax.jit, static_argnames=("activation", "row_tile", "out_dtype"))
def deconv_block_forward(x_nchw, params, activation="prelu", row_tile=None,
                         out_dtype=jnp.bfloat16):
    """x_nchw: (N, Cin, H, W) f32. params: output of prepare_params(). -> (N, Cout, H, W)."""
    w_pairs, w_last, gamma_bf, beta_col, alpha_arr = params
    N, Cin, H, W = x_nchw.shape
    Cout = w_last.shape[0]
    HW = H * W

    TH = row_tile if row_tile is not None else _choose_row_tile(H, W)
    assert H % TH == 0, "row_tile must divide H"
    T = TH * W
    assert (T % 128 == 0) or (TH == H), "row tile must be a multiple of 128 lanes"
    num_tiles = H // TH

    # Halo block lane width: one 128-lane block next to the tile is enough to hold one
    # image row when W <= 128; otherwise fall back to a full-tile-width halo block.
    if T % 128 != 0 or W > 128:
        HB = T
    else:
        HB = 128
    RB = T // HB                      # lane-blocks per tile
    NBL = HW // HB - 1                # last valid halo block index

    # Free reshape only; x stays f32 (the bf16 cast happens inside the kernel).
    x_flat = x_nchw.reshape(N, Cin, HW)

    kernel = functools.partial(_deconv_gdn_act_kernel, W=W, T=T, activation=activation)

    out_flat = pl.pallas_call(
        kernel,
        out_shape=jax.ShapeDtypeStruct((N, Cout, HW), out_dtype),
        grid_spec=pltpu.PrefetchScalarGridSpec(
            num_scalar_prefetch=0,
            grid=(N, num_tiles),
            in_specs=[
                # center tile
                pl.BlockSpec((1, Cin, T), lambda n, j: (n, 0, j)),
                # block just before the tile (holds the previous image row); clamped at j==0
                pl.BlockSpec((1, Cin, HB),
                             lambda n, j: (n, 0, jnp.maximum(j * RB - 1, 0))),
                # block just after the tile (holds the next image row); clamped at the end
                pl.BlockSpec((1, Cin, HB),
                             lambda n, j: (n, 0, jnp.minimum((j + 1) * RB, NBL))),
                pl.BlockSpec((4, Cout, 2 * Cin), lambda n, j: (0, 0, 0)),   # paired taps
                pl.BlockSpec((Cout, Cin), lambda n, j: (0, 0)),             # last tap
                pl.BlockSpec((Cout, Cout), lambda n, j: (0, 0)),            # GDN gamma (bf16)
                pl.BlockSpec((Cout, 1), lambda n, j: (0, 0)),               # GDN beta
                pl.BlockSpec(memory_space=pltpu.MemorySpace.SMEM),          # PReLU slope
            ],
            out_specs=pl.BlockSpec((1, Cout, T), lambda n, j: (n, 0, j)),
            scratch_shapes=[pltpu.VMEM((Cin, T + 2 * (W + 1)), jnp.bfloat16)],
        ),
        compiler_params=pltpu.CompilerParams(
            dimension_semantics=("parallel", "parallel"),
            vmem_limit_bytes=_vmem_limit_bytes(),
        ),
    )(x_flat, x_flat, x_flat, w_pairs, w_last, gamma_bf, beta_col, alpha_arr)

    return out_flat.reshape(N, Cout, H, W)     # free reshape back to NCHW


def _reference_forward(x_nchw, w_t, gamma, beta, alpha, activation="prelu"):
    """Pure-JAX f32 reference (independent of the kernel, full precision)."""
    N, Cin, H, W = x_nchw.shape
    Cout = w_t.shape[1]
    x_nhwc = jnp.transpose(x_nchw, (0, 2, 3, 1))
    w_conv = jnp.transpose(jnp.flip(w_t, axis=(2, 3)), (2, 3, 0, 1))
    out = lax.conv_general_dilated(
        x_nhwc, w_conv, window_strides=(1, 1), padding="SAME",
        dimension_numbers=("NHWC", "HWIO", "NHWC"))
    norm = beta.reshape(1, 1, 1, Cout) + jnp.einsum("nhwj,oj->nhwo", out * out, gamma)
    y = out * lax.rsqrt(norm)
    act = activation.lower()
    if act == "prelu":
        y = jnp.where(y > 0, y, alpha * y)
    elif act == "sigmoid":
        y = jax.nn.sigmoid(y)
    return jnp.transpose(y, (0, 3, 1, 2))


if __name__ == "__main__":
    key = jax.random.PRNGKey(0)
    # Small demo shapes consistent with the module; H*W = 256 keeps the lane axis dense
    # and Cin = Cout = 16 matches the bf16 sublane packing.
    N, Cin, Cout, H, W = 2, 16, 16, 16, 16

    k_x, k_w, k_g = jax.random.split(key, 3)
    x = jax.random.normal(k_x, (N, Cin, H, W), jnp.float32)

    # Deterministic synthetic parameters (shapes per the module __init__):
    #   ConvTranspose2d weight (Cin, Cout, 3, 3), no bias
    #   GDN: beta = 1, gamma = 0.1*I + small non-negative perturbation
    #   PReLU: single shared slope, init 0.25
    w_t = 0.1 * jax.random.normal(k_w, (Cin, Cout, 3, 3), jnp.float32)
    gamma = 0.1 * jnp.eye(Cout, dtype=jnp.float32) \
        + 0.01 * jax.random.uniform(k_g, (Cout, Cout), jnp.float32)
    beta = jnp.ones((Cout,), jnp.float32)
    alpha = jnp.float32(0.25)

    params = prepare_params(w_t, gamma, beta, alpha)

    # row_tile=8 forces 2 spatial tiles so the cross-tile halo path is exercised;
    # tolerances are against a full-f32 reference (kernel uses bf16 MXU operands and a
    # bf16 output by default, so the comparison quantifies the real low-precision drift).
    for act in ("prelu", "sigmoid", "none"):
        out = deconv_block_forward(x, params, activation=act, row_tile=8)
        out = jax.block_until_ready(out)
        ref = _reference_forward(x, w_t, gamma, beta, alpha, activation=act)
        assert out.shape == (N, Cout, H, W), out.shape
        err = float(jnp.max(jnp.abs(out.astype(jnp.float32) - ref)))
        assert jnp.allclose(out.astype(jnp.float32), ref, atol=5e-2, rtol=5e-2), (act, err)

    # Also exercise the auto-chosen tile size (single tile at this demo size).
    out2 = jax.block_until_ready(deconv_block_forward(x, params))
    ref2 = _reference_forward(x, w_t, gamma, beta, alpha)
    assert jnp.allclose(out2.astype(jnp.float32), ref2, atol=5e-2, rtol=5e-2)

    print("KERNEL_OK")
</pallas_src>

<mosaic_0001>
module attributes {stable_mosaic.version = 11 : i64} {
  func.func @_deconv_gdn_act_kernel(%arg0: i32, %arg1: i32, %arg2: memref<1x16x128xf32, #tpu.memory_space<vmem>>, %arg3: memref<1x16x128xf32, #tpu.memory_space<vmem>>, %arg4: memref<1x16x128xf32, #tpu.memory_space<vmem>>, %arg5: memref<4x16x32xbf16, #tpu.memory_space<vmem>>, %arg6: memref<16x16xbf16, #tpu.memory_space<vmem>>, %arg7: memref<16x16xbf16, #tpu.memory_space<vmem>>, %arg8: memref<16x1xf32, #tpu.memory_space<vmem>>, %arg9: memref<1xf32, #tpu.memory_space<smem>>, %arg10: memref<1x16x128xbf16, #tpu.memory_space<vmem>>, %arg11: memref<16x162xbf16, #tpu.memory_space<vmem>>) attributes {dimension_semantics = [#tpu.dimension_semantics<parallel>, #tpu.dimension_semantics<parallel>], iteration_bounds = array<i64: 2, 2>, scalar_prefetch = 0 : i64, scratch_operands = 1 : i64, tpu.core_type = #tpu.core_type<tc>, window_params = [{transform_indices = @transform_0, window_bounds = array<i64: 1, 16, 128>}, {transform_indices = @transform_1, window_bounds = array<i64: 1, 16, 128>}, {transform_indices = @transform_2, window_bounds = array<i64: 1, 16, 128>}, {pipeline_mode = #tpu.pipeline_mode<synchronous>, transform_indices = @transform_3, window_bounds = array<i64: 4, 16, 32>}, {pipeline_mode = #tpu.pipeline_mode<synchronous>, transform_indices = @transform_4, window_bounds = array<i64: 16, 16>}, {pipeline_mode = #tpu.pipeline_mode<synchronous>, transform_indices = @transform_5, window_bounds = array<i64: 16, 16>}, {pipeline_mode = #tpu.pipeline_mode<synchronous>, transform_indices = @transform_6, window_bounds = array<i64: 16, 1>}, {transform_indices = @transform_7, window_bounds = array<i64: 1>}, {transform_indices = @transform_8, window_bounds = array<i64: 1, 16, 128>}]} {
    %c0_i32 = arith.constant 0 : i32
    %0 = arith.cmpi eq, %arg1, %c0_i32 : i32
    %c1_i32 = arith.constant 1 : i32
    %1 = arith.cmpi eq, %arg1, %c1_i32 : i32
    %c0 = arith.constant 0 : index
    %c0_0 = arith.constant 0 : index
    %c112 = arith.constant 112 : index
    %2 = vector.load %arg3[%c0, %c0_0, %c112] : memref<1x16x128xf32, #tpu.memory_space<vmem>>, vector<1x16x16xf32>
    %3 = vector.shape_cast %2 : vector<1x16x16xf32> to vector<16x16xf32>
    %cst = arith.constant 0.000000e+00 : f32
    %4 = vector.broadcast %cst : f32 to vector<16x16xf32>
    %5 = arith.select %0, %4, %3 : vector<16x16xf32>
    %c0_1 = arith.constant 0 : index
    %c0_2 = arith.constant 0 : index
    %c0_3 = arith.constant 0 : index
    %6 = vector.load %arg4[%c0_1, %c0_2, %c0_3] : memref<1x16x128xf32, #tpu.memory_space<vmem>>, vector<1x16x16xf32>
    %7 = vector.shape_cast %6 : vector<1x16x16xf32> to vector<16x16xf32>
    %cst_4 = arith.constant 0.000000e+00 : f32
    %8 = vector.broadcast %cst_4 : f32 to vector<16x16xf32>
    %9 = arith.select %1, %8, %7 : vector<16x16xf32>
    %cst_5 = arith.constant 0.000000e+00 : bf16
    %10 = vector.broadcast %cst_5 : bf16 to vector<16x1xbf16>
    %c0_6 = arith.constant 0 : index
    %c0_7 = arith.constant 0 : index
    %11 = vector.load %arg11[%c0_6, %c0_7] : memref<16x162xbf16, #tpu.memory_space<vmem>>, vector<16x1xbf16>
    tpu.vector_store %arg11[%c0_6, %c0_7], %10 {strides = array<i32>} : memref<16x162xbf16, #tpu.memory_space<vmem>>, vector<16x1xbf16>,
    %12 = arith.truncf %5 : vector<16x16xf32> to vector<16x16xbf16>
    %c0_8 = arith.constant 0 : index
    %c1 = arith.constant 1 : index
    %13 = vector.load %arg11[%c0_8, %c1] : memref<16x162xbf16, #tpu.memory_space<vmem>>, vector<16x16xbf16>
    tpu.vector_store %arg11[%c0_8, %c1], %12 {strides = array<i32>} : memref<16x162xbf16, #tpu.memory_space<vmem>>, vector<16x16xbf16>,
    %c0_9 = arith.constant 0 : index
    %c0_10 = arith.constant 0 : index
    %c0_11 = arith.constant 0 : index
    %14 = vector.load %arg2[%c0_9, %c0_10, %c0_11] : memref<1x16x128xf32, #tpu.memory_space<vmem>>, vector<1x16x128xf32>
    %15 = vector.shape_cast %14 : vector<1x16x128xf32> to vector<16x128xf32>
    %16 = arith.truncf %15 : vector<16x128xf32> to vector<16x128xbf16>
    %c0_12 = arith.constant 0 : index
    %c17 = arith.constant 17 : index
    %17 = vector.load %arg11[%c0_12, %c17] : memref<16x162xbf16, #tpu.memory_space<vmem>>, vector<16x128xbf16>
    tpu.vector_store %arg11[%c0_12, %c17], %16 {strides = array<i32>} : memref<16x162xbf16, #tpu.memory_space<vmem>>, vector<16x128xbf16>,
    %18 = arith.truncf %9 : vector<16x16xf32> to vector<16x16xbf16>
    %c0_13 = arith.constant 0 : index
    %c145 = arith.constant 145 : index
    %19 = vector.load %arg11[%c0_13, %c145] : memref<16x162xbf16, #tpu.memory_space<vmem>>, vector<16x16xbf16>
    tpu.vector_store %arg11[%c0_13, %c145], %18 {strides = array<i32>} : memref<16x162xbf16, #tpu.memory_space<vmem>>, vector<16x16xbf16>,
    %c0_14 = arith.constant 0 : index
    %c161 = arith.constant 161 : index
    %20 = vector.load %arg11[%c0_14, %c161] : memref<16x162xbf16, #tpu.memory_space<vmem>>, vector<16x1xbf16>
    tpu.vector_store %arg11[%c0_14, %c161], %10 {strides = array<i32>} : memref<16x162xbf16, #tpu.memory_space<vmem>>, vector<16x1xbf16>,
    %21 = tpu.iota {dimensions = array<i32: 1>} : vector<1x128xi32>
    %c16_i32 = arith.constant 16 : i32
    %c0_i32_15 = arith.constant 0 : i32
    %22 = arith.cmpi eq, %c16_i32, %c0_i32_15 : i32
    %c1_i32_16 = arith.constant 1 : i32
    %23 = arith.select %22, %c1_i32_16, %c16_i32 : i32
    %24 = vector.broadcast %23 : i32 to vector<1x128xi32>
    %25 = arith.remsi %21, %24 : vector<1x128xi32>
    %c0_i32_17 = arith.constant 0 : i32
    %26 = vector.broadcast %c0_i32_17 : i32 to vector<1x128xi32>
    %27 = arith.cmpi ne, %25, %26 : vector<1x128xi32>
    %c0_i32_18 = arith.constant 0 : i32
    %28 = vector.broadcast %c0_i32_18 : i32 to vector<1x128xi32>
    %29 = arith.cmpi slt, %25, %28 : vector<1x128xi32>
    %c0_i32_19 = arith.constant 0 : i32
    %30 = arith.cmpi slt, %23, %c0_i32_19 : i32
    %31 = vector.broadcast %30 : i1 to vector<1x128xi1>
    %32 = vector.broadcast %31 : vector<1x128xi1> to vector<1x128xi1>
    %33 = arith.xori %29, %32 : vector<1x128xi1>
    %34 = arith.andi %33, %27 : vector<1x128xi1>
    %35 = vector.broadcast %23 : i32 to vector<1x128xi32>
    %36 = arith.addi %25, %35 : vector<1x128xi32>
    %37 = arith.select %34, %36, %25 : vector<1x128xi1>, vector<1x128xi32>
    %c0_i32_20 = arith.constant 0 : i32
    %38 = vector.broadcast %c0_i32_20 : i32 to vector<1x128xi32>
    %39 = arith.cmpi ne, %37, %38 : vector<1x128xi32>
    %c15_i32 = arith.constant 15 : i32
    %40 = vector.broadcast %c15_i32 : i32 to vector<1x128xi32>
    %41 = arith.cmpi ne, %37, %40 : vector<1x128xi32>
    %c0_21 = arith.constant 0 : index
    %c0_22 = arith.constant 0 : index
    %42 = vector.load %arg11[%c0_21, %c0_22] : memref<16x162xbf16, #tpu.memory_space<vmem>>, vector<16x128xbf16>
    %cst_23 = arith.constant 0.000000e+00 : bf16
    %43 = vector.broadcast %cst_23 : bf16 to vector<16x128xbf16>
    %44 = vector.shape_cast %39 : vector<1x128xi1> to vector<1x128xi1>
    %45 = vector.broadcast %44 : vector<1x128xi1> to vector<16x128xi1>
    %46 = arith.select %45, %42, %43 : vector<16x128xi1>, vector<16x128xbf16>
    %c0_24 = arith.constant 0 : index
    %c1_25 = arith.constant 1 : index
    %47 = vector.load %arg11[%c0_24, %c1_25] : memref<16x162xbf16, #tpu.memory_space<vmem>>, vector<16x128xbf16>
    %c0_26 = arith.constant 0 : index
    %c2 = arith.constant 2 : index
    %48 = vector.load %arg11[%c0_26, %c2] : memref<16x162xbf16, #tpu.memory_space<vmem>>, vector<16x128xbf16>
    %cst_27 = arith.constant 0.000000e+00 : bf16
    %49 = vector.broadcast %cst_27 : bf16 to vector<16x128xbf16>
    %50 = vector.shape_cast %41 : vector<1x128xi1> to vector<1x128xi1>
    %51 = vector.broadcast %50 : vector<1x128xi1> to vector<16x128xi1>
    %52 = arith.select %51, %48, %49 : vector<16x128xi1>, vector<16x128xbf16>
    %c0_28 = arith.constant 0 : index
    %c16 = arith.constant 16 : index
    %53 = vector.load %arg11[%c0_28, %c16] : memref<16x162xbf16, #tpu.memory_space<vmem>>, vector<16x128xbf16>
    %cst_29 = arith.constant 0.000000e+00 : bf16
    %54 = vector.broadcast %cst_29 : bf16 to vector<16x128xbf16>
    %55 = vector.shape_cast %39 : vector<1x128xi1> to vector<1x128xi1>
    %56 = vector.broadcast %55 : vector<1x128xi1> to vector<16x128xi1>
    %57 = arith.select %56, %53, %54 : vector<16x128xi1>, vector<16x128xbf16>
    %c0_30 = arith.constant 0 : index
    %c17_31 = arith.constant 17 : index
    %58 = vector.load %arg11[%c0_30, %c17_31] : memref<16x162xbf16, #tpu.memory_space<vmem>>, vector<16x128xbf16>
    %c0_32 = arith.constant 0 : index
    %c18 = arith.constant 18 : index
    %59 = vector.load %arg11[%c0_32, %c18] : memref<16x162xbf16, #tpu.memory_space<vmem>>, vector<16x128xbf16>
    %cst_33 = arith.constant 0.000000e+00 : bf16
    %60 = vector.broadcast %cst_33 : bf16 to vector<16x128xbf16>
    %61 = vector.shape_cast %41 : vector<1x128xi1> to vector<1x128xi1>
    %62 = vector.broadcast %61 : vector<1x128xi1> to vector<16x128xi1>
    %63 = arith.select %62, %59, %60 : vector<16x128xi1>, vector<16x128xbf16>
    %c0_34 = arith.constant 0 : index
    %c32 = arith.constant 32 : index
    %64 = vector.load %arg11[%c0_34, %c32] : memref<16x162xbf16, #tpu.memory_space<vmem>>, vector<16x128xbf16>
    %cst_35 = arith.constant 0.000000e+00 : bf16
    %65 = vector.broadcast %cst_35 : bf16 to vector<16x128xbf16>
    %66 = vector.shape_cast %39 : vector<1x128xi1> to vector<1x128xi1>
    %67 = vector.broadcast %66 : vector<1x128xi1> to vector<16x128xi1>
    %68 = arith.select %67, %64, %65 : vector<16x128xi1>, vector<16x128xbf16>
    %c0_36 = arith.constant 0 : index
    %c33 = arith.constant 33 : index
    %69 = vector.load %arg11[%c0_36, %c33] : memref<16x162xbf16, #tpu.memory_space<vmem>>, vector<16x128xbf16>
    %c0_37 = arith.constant 0 : index
    %c34 = arith.constant 34 : index
    %70 = vector.load %arg11[%c0_37, %c34] : memref<16x162xbf16, #tpu.memory_space<vmem>>, vector<16x128xbf16>
    %cst_38 = arith.constant 0.000000e+00 : bf16
    %71 = vector.broadcast %cst_38 : bf16 to vector<16x128xbf16>
    %72 = vector.shape_cast %41 : vector<1x128xi1> to vector<1x128xi1>
    %73 = vector.broadcast %72 : vector<1x128xi1> to vector<16x128xi1>
    %74 = arith.select %73, %70, %71 : vector<16x128xi1>, vector<16x128xbf16>
    %c0_39 = arith.constant 0 : index
    %c0_40 = arith.constant 0 : index
    %c0_41 = arith.constant 0 : index
    %75 = vector.load %arg5[%c0_39, %c0_40, %c0_41] : memref<4x16x32xbf16, #tpu.memory_space<vmem>>, vector<1x16x32xbf16>
    %76 = vector.shape_cast %75 : vector<1x16x32xbf16> to vector<16x32xbf16>
    %77 = tpu.concatenate %46, %47 in 0 : vector<16x128xbf16>, vector<16x128xbf16> -> vector<32x128xbf16>
    %cst_42 = arith.constant dense<0.000000e+00> : vector<16x128xf32>
    %78 = tpu.matmul %76, %77, %cst_42 {dimension_numbers = #tpu.dot_dimension_numbers<[1], [0], [0], [1], [0, 0, 1, 1], [], []>} : vector<16x32xbf16>, vector<32x128xbf16>, vector<16x128xf32> -> vector<16x128xf32>
    %79 = tpu.concatenate %52, %57 in 0 : vector<16x128xbf16>, vector<16x128xbf16> -> vector<32x128xbf16>
    %c1_43 = arith.constant 1 : index
    %c0_44 = arith.constant 0 : index
    %c0_45 = arith.constant 0 : index
    %80 = vector.load %arg5[%c1_43, %c0_44, %c0_45] : memref<4x16x32xbf16, #tpu.memory_space<vmem>>, vector<1x16x32xbf16>
    %81 = vector.shape_cast %80 : vector<1x16x32xbf16> to vector<16x32xbf16>
    %cst_46 = arith.constant dense<0.000000e+00> : vector<16x128xf32>
    %82 = tpu.matmul %81, %79, %cst_46 {dimension_numbers = #tpu.dot_dimension_numbers<[1], [0], [0], [1], [0, 0, 1, 1], [], []>} : vector<16x32xbf16>, vector<32x128xbf16>, vector<16x128xf32> -> vector<16x128xf32>
    %83 = arith.addf %78, %82 : vector<16x128xf32>
    %84 = tpu.concatenate %58, %63 in 0 : vector<16x128xbf16>, vector<16x128xbf16> -> vector<32x128xbf16>
    %c2_47 = arith.constant 2 : index
    %c0_48 = arith.constant 0 : index
    %c0_49 = arith.constant 0 : index
    %85 = vector.load %arg5[%c2_47, %c0_48, %c0_49] : memref<4x16x32xbf16, #tpu.memory_space<vmem>>, vector<1x16x32xbf16>
    %86 = vector.shape_cast %85 : vector<1x16x32xbf16> to vector<16x32xbf16>
    %cst_50 = arith.constant dense<0.000000e+00> : vector<16x128xf32>
    %87 = tpu.matmul %86, %84, %cst_50 {dimension_numbers = #tpu.dot_dimension_numbers<[1], [0], [0], [1], [0, 0, 1, 1], [], []>} : vector<16x32xbf16>, vector<32x128xbf16>, vector<16x128xf32> -> vector<16x128xf32>
    %88 = arith.addf %83, %87 : vector<16x128xf32>
    %89 = tpu.concatenate %68, %69 in 0 : vector<16x128xbf16>, vector<16x128xbf16> -> vector<32x128xbf16>
    %c3 = arith.constant 3 : index
    %c0_51 = arith.constant 0 : index
    %c0_52 = arith.constant 0 : index
    %90 = vector.load %arg5[%c3, %c0_51, %c0_52] : memref<4x16x32xbf16, #tpu.memory_space<vmem>>, vector<1x16x32xbf16>
    %91 = vector.shape_cast %90 : vector<1x16x32xbf16> to vector<16x32xbf16>
    %cst_53 = arith.constant dense<0.000000e+00> : vector<16x128xf32>
    %92 = tpu.matmul %91, %89, %cst_53 {dimension_numbers = #tpu.dot_dimension_numbers<[1], [0], [0], [1], [0, 0, 1, 1], [], []>} : vector<16x32xbf16>, vector<32x128xbf16>, vector<16x128xf32> -> vector<16x128xf32>
    %93 = arith.addf %88, %92 : vector<16x128xf32>
    %c0_54 = arith.constant 0 : index
    %c0_55 = arith.constant 0 : index
    %94 = vector.load %arg6[%c0_54, %c0_55] : memref<16x16xbf16, #tpu.memory_space<vmem>>, vector<16x16xbf16>
    %cst_56 = arith.constant dense<0.000000e+00> : vector<16x128xf32>
    %95 = tpu.matmul %94, %74, %cst_56 {dimension_numbers = #tpu.dot_dimension_numbers<[1], [0], [0], [1], [0, 0, 1, 1], [], []>} : vector<16x16xbf16>, vector<16x128xbf16>, vector<16x128xf32> -> vector<16x128xf32>
    %96 = arith.addf %93, %95 : vector<16x128xf32>
    %c0_57 = arith.constant 0 : index
    %c0_58 = arith.constant 0 : index
    %97 = vector.load %arg8[%c0_57, %c0_58] : memref<16x1xf32, #tpu.memory_space<vmem>>, vector<16x1xf32>
    %c0_59 = arith.constant 0 : index
    %c0_60 = arith.constant 0 : index
    %98 = vector.load %arg7[%c0_59, %c0_60] : memref<16x16xbf16, #tpu.memory_space<vmem>>, vector<16x16xbf16>
    %99 = arith.mulf %96, %96 : vector<16x128xf32>
    %100 = arith.truncf %99 : vector<16x128xf32> to vector<16x128xbf16>
    %cst_61 = arith.constant dense<0.000000e+00> : vector<16x128xf32>
    %101 = tpu.matmul %98, %100, %cst_61 {dimension_numbers = #tpu.dot_dimension_numbers<[1], [0], [0], [1], [0, 0, 1, 1], [], []>} : vector<16x16xbf16>, vector<16x128xbf16>, vector<16x128xf32> -> vector<16x128xf32>
    %102 = vector.broadcast %97 : vector<16x1xf32> to vector<16x128xf32>
    %103 = arith.addf %102, %101 : vector<16x128xf32>
    %cst_62 = arith.constant 9.99999971E-10 : f32
    %104 = vector.broadcast %cst_62 : f32 to vector<16x128xf32>
    %105 = arith.maximumf %103, %104 : vector<16x128xf32>
    %106 = math.rsqrt %105 : vector<16x128xf32>
    %107 = arith.mulf %96, %106 : vector<16x128xf32>
    %c0_63 = arith.constant 0 : index
    %108 = memref.load %arg9[%c0_63] : memref<1xf32, #tpu.memory_space<smem>>
    %cst_64 = arith.constant 0.000000e+00 : f32
    %109 = vector.broadcast %cst_64 : f32 to vector<16x128xf32>
    %110 = arith.cmpf ogt, %107, %109 : vector<16x128xf32>
    %111 = vector.broadcast %108 : f32 to vector<16x128xf32>
    %112 = arith.mulf %111, %107 : vector<16x128xf32>
    %113 = arith.select %110, %107, %112 : vector<16x128xi1>, vector<16x128xf32>
    %114 = arith.truncf %113 : vector<16x128xf32> to vector<16x128xbf16>
    %c0_65 = arith.constant 0 : index
    %c0_66 = arith.constant 0 : index
    %c0_67 = arith.constant 0 : index
    %115 = vector.load %arg10[%c0_65, %c0_66, %c0_67] : memref<1x16x128xbf16, #tpu.memory_space<vmem>>, vector<1x16x128xbf16>
    %116 = vector.shape_cast %115 : vector<1x16x128xbf16> to vector<16x128xbf16>
    %117 = vector.shape_cast %114 : vector<16x128xbf16> to vector<1x16x128xbf16>
    tpu.vector_store %arg10[%c0_65, %c0_66, %c0_67], %117 {strides = array<i32>} : memref<1x16x128xbf16, #tpu.memory_space<vmem>>, vector<1x16x128xbf16>,
    return
  }
  func.func @transform_0(%arg0: i32, %arg1: i32) -> (i32, i32, i32) {
    %c0_i32 = arith.constant 0 : i32
    %c0_i32_0 = arith.constant 0 : i32
    return %arg0, %c0_i32, %arg1 : i32, i32, i32
  }
  func.func @transform_1(%arg0: i32, %arg1: i32) -> (i32, i32, i32) {
    %c1_i32 = arith.constant 1 : i32
    %0 = arith.muli %arg1, %c1_i32 : i32
    %c1_i32_0 = arith.constant 1 : i32
    %1 = arith.subi %0, %c1_i32_0 : i32
    %c0_i32 = arith.constant 0 : i32
    %2 = arith.maxsi %1, %c0_i32 : i32
    %c0_i32_1 = arith.constant 0 : i32
    %c0_i32_2 = arith.constant 0 : i32
    return %arg0, %c0_i32_1, %2 : i32, i32, i32
  }
  func.func @transform_2(%arg0: i32, %arg1: i32) -> (i32, i32, i32) {
    %c1_i32 = arith.constant 1 : i32
    %0 = arith.addi %arg1, %c1_i32 : i32
    %c1_i32_0 = arith.constant 1 : i32
    %1 = arith.muli %0, %c1_i32_0 : i32
    %c1_i32_1 = arith.constant 1 : i32
    %2 = arith.minsi %1, %c1_i32_1 : i32
    %c0_i32 = arith.constant 0 : i32
    %c0_i32_2 = arith.constant 0 : i32
    return %arg0, %c0_i32, %2 : i32, i32, i32
  }
  func.func @transform_3(%arg0: i32, %arg1: i32) -> (i32, i32, i32) {
    %c0_i32 = arith.constant 0 : i32
    %c0_i32_0 = arith.constant 0 : i32
    %c0_i32_1 = arith.constant 0 : i32
    %c0_i32_2 = arith.constant 0 : i32
    return %c0_i32, %c0_i32_0, %c0_i32_1 : i32, i32, i32
  }
  func.func @transform_4(%arg0: i32, %arg1: i32) -> (i32, i32) {
    %c0_i32 = arith.constant 0 : i32
    %c0_i32_0 = arith.constant 0 : i32
    %c0_i32_1 = arith.constant 0 : i32
    return %c0_i32, %c0_i32_0 : i32, i32
  }
  func.func @transform_5(%arg0: i32, %arg1: i32) -> (i32, i32) {
    %c0_i32 = arith.constant 0 : i32
    %c0_i32_0 = arith.constant 0 : i32
    %c0_i32_1 = arith.constant 0 : i32
    return %c0_i32, %c0_i32_0 : i32, i32
  }
  func.func @transform_6(%arg0: i32, %arg1: i32) -> (i32, i32) {
    %c0_i32 = arith.constant 0 : i32
    %c0_i32_0 = arith.constant 0 : i32
    %c0_i32_1 = arith.constant 0 : i32
    return %c0_i32, %c0_i32_0 : i32, i32
  }
  func.func @transform_7(%arg0: i32, %arg1: i32) -> i32 {
    %c0_i32 = arith.constant 0 : i32
    %c0_i32_0 = arith.constant 0 : i32
    return %c0_i32 : i32
  }
  func.func @transform_8(%arg0: i32, %arg1: i32) -> (i32, i32, i32) {
    %c0_i32 = arith.constant 0 : i32
    %c0_i32_0 = arith.constant 0 : i32
    return %arg0, %c0_i32, %arg1 : i32, i32, i32
  }
}

</mosaic_0001>

<llo_original>
// kernel: deconv_block_forward.1
$region0: #{deconv_block_forward.1}
  #allocation0 [shape = 'u32[]', space=smem, size = 0x4, offset = 0x4, fixed_abs, tag = 'smem constant byte address 0x4 - core index']
  #allocation1 [shape = 'u32[144,128]{1,0:T(1,128)}', space=vmem, size = 0x12000, scoped, tag = 'internal scratch']
  #allocation2 [shape = 'bf16[16,162]{1,0:T(8,128)(2,1)}', space=vmem, size = 0x2000, scoped, tag = 'scratch operand']
  #allocation3 [shape = 'f32[1]{0:T(128)S(6)}', space=smem, size = 0x200, scoped, tag = 'scoped memory for deconv_block_forward.1']
  %s0 = inlined_call_operand.vmem [shape: f32[2,16,256], index: 0, kind: input, shape index: {}, may-alias: {0,1,2}]
  %s1 = inlined_call_operand.vmem [shape: f32[2,16,256], index: 1, kind: input, shape index: {}, may-alias: {0,1,2}]
  %s2 = inlined_call_operand.vmem [shape: f32[2,16,256], index: 2, kind: input, shape index: {}, may-alias: {0,1,2}]
  %s3 = inlined_call_operand.vmem [shape: bf16[4,16,32], index: 3, kind: input, shape index: {}]
  %s4 = inlined_call_operand.vmem [shape: bf16[16,16], index: 4, kind: input, shape index: {}]
  %s5 = inlined_call_operand.vmem [shape: bf16[16,16], index: 5, kind: input, shape index: {}]
  %s6 = inlined_call_operand.vmem [shape: f32[16,1], index: 6, kind: input, shape index: {}]
  %s7 = inlined_call_operand.<no memory space> [shape: f32[1], index: 7, kind: input, shape index: {}]
  %s8 = inlined_call_operand.vmem [shape: bf16[2,16,256], index: 8, kind: output, shape index: {}]
  %s9 = sld [smem:[#allocation0]]
  $region216: #{deconv_block_forward.1} parent=0
    _
  %s11 = ssub.s32 1, %s9
  %s12 = scalar_select 0, %s11, %s9
  %13 = sst [smem:[#allocation3]] %s7
  $region1: #{deconv_block_forward.1} parent=0
    #allocation4 [shape = 'u8[16384]{0}', space=vmem, size = 0x4000, scoped, tag = 'input window, operand 0']
    #allocation5 [shape = 'u8[16384]{0}', space=vmem, size = 0x4000, scoped, tag = 'input window, operand 1']
    #allocation6 [shape = 'u8[16384]{0}', space=vmem, size = 0x4000, scoped, tag = 'input window, operand 2']
    #allocation7 [shape = 'u8[8192]{0}', space=vmem, size = 0x2000, scoped, tag = 'output window, operand 0']
    loop: start=0, step=1, limit=6
    $region2: #{deconv_block_forward.1} parent=1 // loop_pre_header
      _
    $region3: #{deconv_block_forward.1} parent=1 // loop_header
      %s15 = sphi 0, %s19
      %p16 = scmp.ge.s32.totalorder %s15, 6
      %s22 = sphi 0, %s34
      %s23 = sphi 0, %s30
      %s24 = sphi 0, %s22
      %s25 = sphi 0, %s23
      %s26 = sphi 0, %s24
      %s27 = sphi 0, %s25
      %s39 = sphi 0, %s41
      %s42 = sphi 0, %s39
      %s43 = sphi 0, %s42
      %s59 = sphi 0, %s43
      %s73 = sphi 0, %s75
      %s76 = sphi 0, %s73
      %s77 = sphi 0, %s76
      %s93 = sphi 0, %s77
      %s107 = sphi 0, %s109
      %s110 = sphi 0, %s107
      %s111 = sphi 0, %s110
      %s127 = sphi 0, %s111
      %s131 = sphi 0, %s131
      %s133 = sphi 0, %s131
      %s134 = sphi 0, %s133
      %s148 = sphi 0, %s134
      %s152 = sphi 0, %s152
      %s154 = sphi 0, %s152
      %s155 = sphi 0, %s154
      %s169 = sphi 0, %s155
      %s173 = sphi 0, %s173
      %s175 = sphi 0, %s173
      %s176 = sphi 0, %s175
      %s190 = sphi 0, %s176
      %s194 = sphi 0, %s194
      %s196 = sphi 0, %s194
      %s197 = sphi 0, %s196
      %s211 = sphi 0, %s197
      %s215 = sphi 0, %s215
      %s217 = sphi 0, %s215
      %s218 = sphi 0, %s217
      %s232 = sphi 0, %s218
      %s240 = sphi 0, %s242
      %s243 = sphi 0, %s240
      %s244 = sphi 0, %s243
      %s260 = sphi 0, %s244
    $region4: #{deconv_block_forward.1} parent=1 // loop_header_branch
      %18 = sbr.rel (%p16) target = $region8
    $region5: #{deconv_block_forward.1} parent=1 // loop_body
      %s20 = ssub.s32 %s15, 1
      %s21 = ssub.s32 %s15, 2
      %s28 = sadd.s32 1, %s23
      %p29 = scmp.ge.s32.totalorder %s28, 2
      %s30 = scalar_select %p29, 0, %s28
      %s31 = sadd.s32 1, %s22
      %s32 = scalar_select %p29, %s31, %s22
      %p33 = scmp.ge.s32.totalorder %s32, 2
      %s34 = scalar_select %p33, 0, %s32
      %s35 = ssub.s32 %s22, %s34
      %s36 = ssub.s32 %s23, %s30
      %s37 = sor.u32 %s35, %s36
      %p38 = scmp.eq.s32.totalorder %s37, 0
      %s40 = sadd.s32 %s39, 1
      %s41 = scalar_select %p38, %s39, %s40
      %p44 = pneg %p38
      %p45 = scmp.eq.s32.totalorder %s15, 3
      %p46 = por %p44, %p45
      %p47 = scmp.ne.s32.totalorder %s39, %s42
      %p48 = scmp.eq.s32.totalorder %s15, 0
      %p49 = por %p47, %p48
      %p50 = scmp.ne.s32.totalorder %s39, %s42
      %p51 = scmp.eq.s32.totalorder %s20, 3
      %p52 = por %p50, %p51
      %p53 = scmp.ne.s32.totalorder %s42, %s43
      %p54 = scmp.eq.s32.totalorder %s20, 0
      %p55 = por %p53, %p54
      %p56 = scmp.ne.s32.totalorder %s42, %s43
      %p57 = scmp.eq.s32.totalorder %s21, 3
      %p58 = por %p56, %p57
      %p60 = scmp.ne.s32.totalorder %s43, %s59
      %p61 = scmp.eq.s32.totalorder %s21, 0
      %p62 = por %p60, %p61
      %s63 = ssub.s32 %s23, 1
      %p64 = scmp.gt.s32.totalorder %s63, 0
      %s65 = scalar_select %p64, %s63, 0
      %s66 = ssub.s32 %s30, 1
      %p67 = scmp.gt.s32.totalorder %s66, 0
      %s68 = scalar_select %p67, %s66, 0
      %s69 = ssub.s32 %s22, %s34
      %s70 = ssub.s32 %s65, %s68
      %s71 = sor.u32 %s69, %s70
      %p72 = scmp.eq.s32.totalorder %s71, 0
      %s74 = sadd.s32 %s73, 1
      %s75 = scalar_select %p72, %s73, %s74
      %p78 = pneg %p72
      %p79 = scmp.eq.s32.totalorder %s15, 3
      %p80 = por %p78, %p79
      %p81 = scmp.ne.s32.totalorder %s73, %s76
      %p82 = scmp.eq.s32.totalorder %s15, 0
      %p83 = por %p81, %p82
      %p84 = scmp.ne.s32.totalorder %s73, %s76
      %p85 = scmp.eq.s32.totalorder %s20, 3
      %p86 = por %p84, %p85
      %p87 = scmp.ne.s32.totalorder %s76, %s77
      %p88 = scmp.eq.s32.totalorder %s20, 0
      %p89 = por %p87, %p88
      %p90 = scmp.ne.s32.totalorder %s76, %s77
      %p91 = scmp.eq.s32.totalorder %s21, 3
      %p92 = por %p90, %p91
      %p94 = scmp.ne.s32.totalorder %s77, %s93
      %p95 = scmp.eq.s32.totalorder %s21, 0
      %p96 = por %p94, %p95
      %s97 = sadd.s32 %s23, 1
      %p98 = scmp.lt.s32.totalorder %s97, 1
      %s99 = scalar_select %p98, %s97, 1
      %s100 = sadd.s32 %s30, 1
      %p101 = scmp.lt.s32.totalorder %s100, 1
      %s102 = scalar_select %p101, %s100, 1
      %s103 = ssub.s32 %s22, %s34
      %s104 = ssub.s32 %s99, %s102
      %s105 = sor.u32 %s103, %s104
      %p106 = scmp.eq.s32.totalorder %s105, 0
      %s108 = sadd.s32 %s107, 1
      %s109 = scalar_select %p106, %s107, %s108
      %p112 = pneg %p106
      %p113 = scmp.eq.s32.totalorder %s15, 3
      %p114 = por %p112, %p113
      %p115 = scmp.ne.s32.totalorder %s107, %s110
      %p116 = scmp.eq.s32.totalorder %s15, 0
      %p117 = por %p115, %p116
      %p118 = scmp.ne.s32.totalorder %s107, %s110
      %p119 = scmp.eq.s32.totalorder %s20, 3
      %p120 = por %p118, %p119
      %p121 = scmp.ne.s32.totalorder %s110, %s111
      %p122 = scmp.eq.s32.totalorder %s20, 0
      %p123 = por %p121, %p122
      %p124 = scmp.ne.s32.totalorder %s110, %s111
      %p125 = scmp.eq.s32.totalorder %s21, 3
      %p126 = por %p124, %p125
      %p128 = scmp.ne.s32.totalorder %s111, %s127
      %p129 = scmp.eq.s32.totalorder %s21, 0
      %p130 = por %p128, %p129
      %s132 = sadd.s32 %s131, 1
      %p135 = scmp.eq.s32.totalorder %s15, 3
      %p136 = scmp.ne.s32.totalorder %s131, %s133
      %p137 = scmp.eq.s32.totalorder %s15, 0
      %p138 = por %p136, %p137
      %p139 = scmp.ne.s32.totalorder %s131, %s133
      %p140 = scmp.eq.s32.totalorder %s20, 3
      %p141 = por %p139, %p140
      %p142 = scmp.ne.s32.totalorder %s133, %s134
      %p143 = scmp.eq.s32.totalorder %s20, 0
      %p144 = por %p142, %p143
      %p145 = scmp.ne.s32.totalorder %s133, %s134
      %p146 = scmp.eq.s32.totalorder %s21, 3
      %p147 = por %p145, %p146
      %p149 = scmp.ne.s32.totalorder %s134, %s148
      %p150 = scmp.eq.s32.totalorder %s21, 0
      %p151 = por %p149, %p150
      %s153 = sadd.s32 %s152, 1
      %p156 = scmp.eq.s32.totalorder %s15, 3
      %p157 = scmp.ne.s32.totalorder %s152, %s154
      %p158 = scmp.eq.s32.totalorder %s15, 0
      %p159 = por %p157, %p158
      %p160 = scmp.ne.s32.totalorder %s152, %s154
      %p161 = scmp.eq.s32.totalorder %s20, 3
      %p162 = por %p160, %p161
      %p163 = scmp.ne.s32.totalorder %s154, %s155
      %p164 = scmp.eq.s32.totalorder %s20, 0
      %p165 = por %p163, %p164
      %p166 = scmp.ne.s32.totalorder %s154, %s155
      %p167 = scmp.eq.s32.totalorder %s21, 3
      %p168 = por %p166, %p167
      %p170 = scmp.ne.s32.totalorder %s155, %s169
      %p171 = scmp.eq.s32.totalorder %s21, 0
      %p172 = por %p170, %p171
      %s174 = sadd.s32 %s173, 1
      %p177 = scmp.eq.s32.totalorder %s15, 3
      %p178 = scmp.ne.s32.totalorder %s173, %s175
      %p179 = scmp.eq.s32.totalorder %s15, 0
      %p180 = por %p178, %p179
      %p181 = scmp.ne.s32.totalorder %s173, %s175
      %p182 = scmp.eq.s32.totalorder %s20, 3
      %p183 = por %p181, %p182
      %p184 = scmp.ne.s32.totalorder %s175, %s176
      %p185 = scmp.eq.s32.totalorder %s20, 0
      %p186 = por %p184, %p185
      %p187 = scmp.ne.s32.totalorder %s175, %s176
      %p188 = scmp.eq.s32.totalorder %s21, 3
      %p189 = por %p187, %p188
      %p191 = scmp.ne.s32.totalorder %s176, %s190
      %p192 = scmp.eq.s32.totalorder %s21, 0
      %p193 = por %p191, %p192
      %s195 = sadd.s32 %s194, 1
      %p198 = scmp.eq.s32.totalorder %s15, 3
      %p199 = scmp.ne.s32.totalorder %s194, %s196
      %p200 = scmp.eq.s32.totalorder %s15, 0
      %p201 = por %p199, %p200
      %p202 = scmp.ne.s32.totalorder %s194, %s196
      %p203 = scmp.eq.s32.totalorder %s20, 3
      %p204 = por %p202, %p203
      %p205 = scmp.ne.s32.totalorder %s196, %s197
      %p206 = scmp.eq.s32.totalorder %s20, 0
      %p207 = por %p205, %p206
      %p208 = scmp.ne.s32.totalorder %s196, %s197
      %p209 = scmp.eq.s32.totalorder %s21, 3
      %p210 = por %p208, %p209
      %p212 = scmp.ne.s32.totalorder %s197, %s211
      %p213 = scmp.eq.s32.totalorder %s21, 0
      %p214 = por %p212, %p213
      %s216 = sadd.s32 %s215, 1
      %p219 = scmp.eq.s32.totalorder %s15, 3
      %p220 = scmp.ne.s32.totalorder %s215, %s217
      %p221 = scmp.eq.s32.totalorder %s15, 0
      %p222 = por %p220, %p221
      %p223 = scmp.ne.s32.totalorder %s215, %s217
      %p224 = scmp.eq.s32.totalorder %s20, 3
      %p225 = por %p223, %p224
      %p226 = scmp.ne.s32.totalorder %s217, %s218
      %p227 = scmp.eq.s32.totalorder %s20, 0
      %p228 = por %p226, %p227
      %p229 = scmp.ne.s32.totalorder %s217, %s218
      %p230 = scmp.eq.s32.totalorder %s21, 3
      %p231 = por %p229, %p230
      %p233 = scmp.ne.s32.totalorder %s218, %s232
      %p234 = scmp.eq.s32.totalorder %s21, 0
      %p235 = por %p233, %p234
      %s236 = ssub.s32 %s22, %s34
      %s237 = ssub.s32 %s23, %s30
      %s238 = sor.u32 %s236, %s237
      %p239 = scmp.eq.s32.totalorder %s238, 0
      %s241 = sadd.s32 %s240, 1
      %s242 = scalar_select %p239, %s240, %s241
      %p245 = pneg %p239
      %p246 = scmp.eq.s32.totalorder %s15, 3
      %p247 = por %p245, %p246
      %p248 = scmp.ne.s32.totalorder %s240, %s243
      %p249 = scmp.eq.s32.totalorder %s15, 0
      %p250 = por %p248, %p249
      %p251 = scmp.ne.s32.totalorder %s240, %s243
      %p252 = scmp.eq.s32.totalorder %s20, 3
      %p253 = por %p251, %p252
      %p254 = scmp.ne.s32.totalorder %s243, %s244
      %p255 = scmp.eq.s32.totalorder %s20, 0
      %p256 = por %p254, %p255
      %p257 = scmp.ne.s32.totalorder %s243, %s244
      %p258 = scmp.eq.s32.totalorder %s21, 3
      %p259 = por %p257, %p258
      %p261 = scmp.ne.s32.totalorder %s244, %s260
      %p262 = scmp.eq.s32.totalorder %s21, 0
      %p263 = por %p261, %p262
      %p264 = scmp.le.s32.totalorder 1, %s15
      %p265 = scmp.lt.s32.totalorder %s15, 5
      %p266 = pnand %p264, %p265
      %p267 = pneg %p266
      // Predicated region
      $region9: #{deconv_block_forward.1} parent=5 // pred_check
        _
      $region10: #{deconv_block_forward.1} parent=5 // pred_check_branch
        %269 = sbr.rel (%p266) target = $region12
      $region11: #{deconv_block_forward.1} parent=5 // pred_region
        %s270 = ssub.s32 %s15, 1
        // Predicated region
        $region13: #{deconv_block_forward.1} parent=11 // pred_check
          %p271 = pneg %p144
        $region14: #{deconv_block_forward.1} parent=11 // pred_check_branch
          %273 = sbr.rel (%p271) target = $region16
        $region15: #{deconv_block_forward.1} parent=11 // pred_region
          _
        $region16: #{deconv_block_forward.1} parent=11 // pred_fallthru
          _
        // Predicated region
        $region17: #{deconv_block_forward.1} parent=11 // pred_check
          %p274 = pneg %p165
        $region18: #{deconv_block_forward.1} parent=11 // pred_check_branch
          %276 = sbr.rel (%p274) target = $region20
        $region19: #{deconv_block_forward.1} parent=11 // pred_region
          _
        $region20: #{deconv_block_forward.1} parent=11 // pred_fallthru
          _
        // Predicated region
        $region21: #{deconv_block_forward.1} parent=11 // pred_check
          %p277 = pneg %p186
        $region22: #{deconv_block_forward.1} parent=11 // pred_check_branch
          %279 = sbr.rel (%p277) target = $region24
        $region23: #{deconv_block_forward.1} parent=11 // pred_region
          _
        $region24: #{deconv_block_forward.1} parent=11 // pred_fallthru
          _
        // Predicated region
        $region25: #{deconv_block_forward.1} parent=11 // pred_check
          %p280 = pneg %p207
        $region26: #{deconv_block_forward.1} parent=11 // pred_check_branch
          %282 = sbr.rel (%p280) target = $region28
        $region27: #{deconv_block_forward.1} parent=11 // pred_region
          _
        $region28: #{deconv_block_forward.1} parent=11 // pred_fallthru
          _
        // Predicated region
        $region29: #{deconv_block_forward.1} parent=11 // pred_check
          %p283 = pneg %p228
        $region30: #{deconv_block_forward.1} parent=11 // pred_check_branch
          %285 = sbr.rel (%p283) target = $region32
        $region31: #{deconv_block_forward.1} parent=11 // pred_region
          _
        $region32: #{deconv_block_forward.1} parent=11 // pred_fallthru
          _
      $region12: #{deconv_block_forward.1} parent=5 // pred_fallthru
        _
      %p286 = scmp.lt.s32.totalorder %s15, 4
      // Predicated region
      $region33: #{deconv_block_forward.1} parent=5 // pred_check
        %p287 = pneg %p286
      $region34: #{deconv_block_forward.1} parent=5 // pred_check_branch
        %289 = sbr.rel (%p287) target = $region36
      $region35: #{deconv_block_forward.1} parent=5 // pred_region
        // Predicated region
        $region37: #{deconv_block_forward.1} parent=35 // pred_check
          %p290 = pneg %p49
        $region38: #{deconv_block_forward.1} parent=35 // pred_check_branch
          %292 = sbr.rel (%p290) target = $region40
        $region39: #{deconv_block_forward.1} parent=35 // pred_region
          %s293 = sand.u32 %s39, 1
          %s294 = sand.u32 %s39, 1
          %s295 = smul.addr %s294, 16
          %s296 = scalar_lea.vmem [#allocation4], %s295
          %s297 = smul.addr %s22, 4
          %s298 = sadd.s32 %s23, %s297
          %s299 = smul.addr %s298, 8
          %s300 = scalar_lea.vmem %s0, %s299
          // Predicated region
          $region41: #{deconv_block_forward.1} parent=39 // pred_check
            _
          $region42: #{deconv_block_forward.1} parent=39 // pred_check_branch
            %302 = sbr.rel (0) target = $region44
          $region43: #{deconv_block_forward.1} parent=39 // pred_region
            // Predicated region
            $region45: #{deconv_block_forward.1} parent=43 // pred_check
              _
            $region46: #{deconv_block_forward.1} parent=43 // pred_check_branch
              %304 = sbr.rel (0) target = $region48
            $region47: #{deconv_block_forward.1} parent=43 // pred_region
              // Predicated region
              $region60: #{deconv_block_forward.1} parent=47 // pred_check
                _
              $region61: #{deconv_block_forward.1} parent=47 // pred_check_branch
                %322 = sbr.rel (0) target = $region63
              $region62: #{deconv_block_forward.1} parent=47 // pred_region
                loop: start=0, step=1, limit=1
                $region64: #{deconv_block_forward.1} parent=62 // loop_pre_header
                  _
                $region65: #{deconv_block_forward.1} parent=62 // loop_header
                  %s324 = sphi 0, %s328
                  %p325 = scmp.ge.s32.totalorder %s324, 1
                  %s329 = sphi %s300, %s300
                  %s330 = sphi %s296, %s296
                $region66: #{deconv_block_forward.1} parent=62 // loop_header_branch
                  %327 = sbr.rel (%p325) target = $region70
                $region67: #{deconv_block_forward.1} parent=62 // loop_body
                  %v331 = vld [vmem:[%s329] sm:$0xff]
                  %332 = vst [vmem:[%s330] sm:$0xff] %v331
                  %v333 = vld [vmem:[%s329 + $0x10] sm:$0xff]
                  %334 = vst [vmem:[%s330 + $0x8] sm:$0xff] %v333
                $region68: #{deconv_block_forward.1} parent=62 // loop_footer
                  %s328 = sadd.s32 1, %s324
                $region69: #{deconv_block_forward.1} parent=62 // loop_footer_branch
                  %323 = sbr.rel target = $region65
                $region70: #{deconv_block_forward.1} parent=62 // loop_exit
                  _
              $region63: #{deconv_block_forward.1} parent=47 // pred_fallthru
                _
              // Predicated region
              $region71: #{deconv_block_forward.1} parent=47 // pred_check
                _
              $region72: #{deconv_block_forward.1} parent=47 // pred_check_branch
                %336 = sbr.rel target = $region74
              $region73: #{deconv_block_forward.1} parent=47 // pred_region
                _
              $region74: #{deconv_block_forward.1} parent=47 // pred_fallthru
                _
            $region48: #{deconv_block_forward.1} parent=43 // pred_fallthru
              _
            // Predicated region
            $region49: #{deconv_block_forward.1} parent=43 // pred_check
              _
            $region50: #{deconv_block_forward.1} parent=43 // pred_check_branch
              %306 = sbr.rel target = $region52
            $region51: #{deconv_block_forward.1} parent=43 // pred_region
              %s308 = ssub.s32 256, 1
              loop: start=0, step=1, limit=1
              $region53: #{deconv_block_forward.1} parent=51 // loop_pre_header
                _
              $region54: #{deconv_block_forward.1} parent=51 // loop_header
                %s310 = sphi 0, %s314
                %p311 = scmp.ge.s32.totalorder %s310, 1
                %s315 = sphi %s300, %s300
                %s316 = sphi %s296, %s296
              $region55: #{deconv_block_forward.1} parent=51 // loop_header_branch
                %313 = sbr.rel (%p311) target = $region59
              $region56: #{deconv_block_forward.1} parent=51 // loop_body
                %v317 = vld [vmem:[%s315] sm:%s308]
                %318 = vst [vmem:[%s316] sm:%s308] %v317
                %v319 = vld [vmem:[%s315 + $0x10] sm:%s308]
                %320 = vst [vmem:[%s316 + $0x8] sm:%s308] %v319
              $region57: #{deconv_block_forward.1} parent=51 // loop_footer
                %s314 = sadd.s32 1, %s310
              $region58: #{deconv_block_forward.1} parent=51 // loop_footer_branch
                %309 = sbr.rel target = $region54
              $region59: #{deconv_block_forward.1} parent=51 // loop_exit
                _
            $region52: #{deconv_block_forward.1} parent=43 // pred_fallthru
              _
          $region44: #{deconv_block_forward.1} parent=39 // pred_fallthru
            _
          %337 = vnop
        $region40: #{deconv_block_forward.1} parent=35 // pred_fallthru
          _
        // Predicated region
        $region75: #{deconv_block_forward.1} parent=35 // pred_check
          %p338 = pneg %p83
        $region76: #{deconv_block_forward.1} parent=35 // pred_check_branch
          %340 = sbr.rel (%p338) target = $region78
        $region77: #{deconv_block_forward.1} parent=35 // pred_region
          %s341 = sand.u32 %s73, 1
          %s342 = sand.u32 %s73, 1
          %s343 = smul.addr %s342, 16
          %s344 = scalar_lea.vmem [#allocation5], %s343
          %s345 = ssub.s32 %s23, 1
          %p346 = scmp.gt.s32.totalorder %s345, 0
          %s347 = scalar_select %p346, %s345, 0
          %s348 = smul.addr %s22, 4
          %s349 = sadd.s32 %s347, %s348
          %s350 = smul.addr %s349, 8
          %s351 = scalar_lea.vmem %s1, %s350
          // Predicated region
          $region79: #{deconv_block_forward.1} parent=77 // pred_check
            _
          $region80: #{deconv_block_forward.1} parent=77 // pred_check_branch
            %353 = sbr.rel (0) target = $region82
          $region81: #{deconv_block_forward.1} parent=77 // pred_region
            // Predicated region
            $region83: #{deconv_block_forward.1} parent=81 // pred_check
              _
            $region84: #{deconv_block_forward.1} parent=81 // pred_check_branch
              %355 = sbr.rel (0) target = $region86
            $region85: #{deconv_block_forward.1} parent=81 // pred_region
              // Predicated region
              $region98: #{deconv_block_forward.1} parent=85 // pred_check
                _
              $region99: #{deconv_block_forward.1} parent=85 // pred_check_branch
                %373 = sbr.rel (0) target = $region101
              $region100: #{deconv_block_forward.1} parent=85 // pred_region
                loop: start=0, step=1, limit=1
                $region102: #{deconv_block_forward.1} parent=100 // loop_pre_header
                  _
                $region103: #{deconv_block_forward.1} parent=100 // loop_header
                  %s375 = sphi 0, %s379
                  %p376 = scmp.ge.s32.totalorder %s375, 1
                  %s380 = sphi %s351, %s351
                  %s381 = sphi %s344, %s344
                $region104: #{deconv_block_forward.1} parent=100 // loop_header_branch
                  %378 = sbr.rel (%p376) target = $region108
                $region105: #{deconv_block_forward.1} parent=100 // loop_body
                  %v382 = vld [vmem:[%s380] sm:$0xff]
                  %383 = vst [vmem:[%s381] sm:$0xff] %v382
                  %v384 = vld [vmem:[%s380 + $0x10] sm:$0xff]
                  %385 = vst [vmem:[%s381 + $0x8] sm:$0xff] %v384
                $region106: #{deconv_block_forward.1} parent=100 // loop_footer
                  %s379 = sadd.s32 1, %s375
                $region107: #{deconv_block_forward.1} parent=100 // loop_footer_branch
                  %374 = sbr.rel target = $region103
                $region108: #{deconv_block_forward.1} parent=100 // loop_exit
                  _
              $region101: #{deconv_block_forward.1} parent=85 // pred_fallthru
                _
              // Predicated region
              $region109: #{deconv_block_forward.1} parent=85 // pred_check
                _
              $region110: #{deconv_block_forward.1} parent=85 // pred_check_branch
                %387 = sbr.rel target = $region112
              $region111: #{deconv_block_forward.1} parent=85 // pred_region
                _
              $region112: #{deconv_block_forward.1} parent=85 // pred_fallthru
                _
            $region86: #{deconv_block_forward.1} parent=81 // pred_fallthru
              _
            // Predicated region
            $region87: #{deconv_block_forward.1} parent=81 // pred_check
              _
            $region88: #{deconv_block_forward.1} parent=81 // pred_check_branch
              %357 = sbr.rel target = $region90
            $region89: #{deconv_block_forward.1} parent=81 // pred_region
              %s359 = ssub.s32 256, 1
              loop: start=0, step=1, limit=1
              $region91: #{deconv_block_forward.1} parent=89 // loop_pre_header
                _
              $region92: #{deconv_block_forward.1} parent=89 // loop_header
                %s361 = sphi 0, %s365
                %p362 = scmp.ge.s32.totalorder %s361, 1
                %s366 = sphi %s351, %s351
                %s367 = sphi %s344, %s344
              $region93: #{deconv_block_forward.1} parent=89 // loop_header_branch
                %364 = sbr.rel (%p362) target = $region97
              $region94: #{deconv_block_forward.1} parent=89 // loop_body
                %v368 = vld [vmem:[%s366] sm:%s359]
                %369 = vst [vmem:[%s367] sm:%s359] %v368
                %v370 = vld [vmem:[%s366 + $0x10] sm:%s359]
                %371 = vst [vmem:[%s367 + $0x8] sm:%s359] %v370
              $region95: #{deconv_block_forward.1} parent=89 // loop_footer
                %s365 = sadd.s32 1, %s361
              $region96: #{deconv_block_forward.1} parent=89 // loop_footer_branch
                %360 = sbr.rel target = $region92
              $region97: #{deconv_block_forward.1} parent=89 // loop_exit
                _
            $region90: #{deconv_block_forward.1} parent=81 // pred_fallthru
              _
          $region82: #{deconv_block_forward.1} parent=77 // pred_fallthru
            _
          %388 = vnop
        $region78: #{deconv_block_forward.1} parent=35 // pred_fallthru
          _
        // Predicated region
        $region113: #{deconv_block_forward.1} parent=35 // pred_check
          %p389 = pneg %p117
        $region114: #{deconv_block_forward.1} parent=35 // pred_check_branch
          %391 = sbr.rel (%p389) target = $region116
        $region115: #{deconv_block_forward.1} parent=35 // pred_region
          %s392 = sand.u32 %s107, 1
          %s393 = sand.u32 %s107, 1
          %s394 = smul.addr %s393, 16
          %s395 = scalar_lea.vmem [#allocation6], %s394
          %s396 = sadd.s32 %s23, 1
          %p397 = scmp.lt.s32.totalorder %s396, 1
          %s398 = scalar_select %p397, %s396, 1
          %s399 = smul.addr %s22, 4
          %s400 = sadd.s32 %s398, %s399
          %s401 = smul.addr %s400, 8
          %s402 = scalar_lea.vmem %s2, %s401
          // Predicated region
          $region117: #{deconv_block_forward.1} parent=115 // pred_check
            _
          $region118: #{deconv_block_forward.1} parent=115 // pred_check_branch
            %404 = sbr.rel (0) target = $region120
          $region119: #{deconv_block_forward.1} parent=115 // pred_region
            // Predicated region
            $region121: #{deconv_block_forward.1} parent=119 // pred_check
              _
            $region122: #{deconv_block_forward.1} parent=119 // pred_check_branch
              %406 = sbr.rel (0) target = $region124
            $region123: #{deconv_block_forward.1} parent=119 // pred_region
              // Predicated region
              $region136: #{deconv_block_forward.1} parent=123 // pred_check
                _
              $region137: #{deconv_block_forward.1} parent=123 // pred_check_branch
                %424 = sbr.rel (0) target = $region139
              $region138: #{deconv_block_forward.1} parent=123 // pred_region
                loop: start=0, step=1, limit=1
                $region140: #{deconv_block_forward.1} parent=138 // loop_pre_header
                  _
                $region141: #{deconv_block_forward.1} parent=138 // loop_header
                  %s426 = sphi 0, %s430
                  %p427 = scmp.ge.s32.totalorder %s426, 1
                  %s431 = sphi %s402, %s402
                  %s432 = sphi %s395, %s395
                $region142: #{deconv_block_forward.1} parent=138 // loop_header_branch
                  %429 = sbr.rel (%p427) target = $region146
                $region143: #{deconv_block_forward.1} parent=138 // loop_body
                  %v433 = vld [vmem:[%s431] sm:$0xff]
                  %434 = vst [vmem:[%s432] sm:$0xff] %v433
                  %v435 = vld [vmem:[%s431 + $0x10] sm:$0xff]
                  %436 = vst [vmem:[%s432 + $0x8] sm:$0xff] %v435
                $region144: #{deconv_block_forward.1} parent=138 // loop_footer
                  %s430 = sadd.s32 1, %s426
                $region145: #{deconv_block_forward.1} parent=138 // loop_footer_branch
                  %425 = sbr.rel target = $region141
                $region146: #{deconv_block_forward.1} parent=138 // loop_exit
                  _
              $region139: #{deconv_block_forward.1} parent=123 // pred_fallthru
                _
              // Predicated region
              $region147: #{deconv_block_forward.1} parent=123 // pred_check
                _
              $region148: #{deconv_block_forward.1} parent=123 // pred_check_branch
                %438 = sbr.rel target = $region150
              $region149: #{deconv_block_forward.1} parent=123 // pred_region
                _
              $region150: #{deconv_block_forward.1} parent=123 // pred_fallthru
                _
            $region124: #{deconv_block_forward.1} parent=119 // pred_fallthru
              _
            // Predicated region
            $region125: #{deconv_block_forward.1} parent=119 // pred_check
              _
            $region126: #{deconv_block_forward.1} parent=119 // pred_check_branch
              %408 = sbr.rel target = $region128
            $region127: #{deconv_block_forward.1} parent=119 // pred_region
              %s410 = ssub.s32 256, 1
              loop: start=0, step=1, limit=1
              $region129: #{deconv_block_forward.1} parent=127 // loop_pre_header
                _
              $region130: #{deconv_block_forward.1} parent=127 // loop_header
                %s412 = sphi 0, %s416
                %p413 = scmp.ge.s32.totalorder %s412, 1
                %s417 = sphi %s402, %s402
                %s418 = sphi %s395, %s395
              $region131: #{deconv_block_forward.1} parent=127 // loop_header_branch
                %415 = sbr.rel (%p413) target = $region135
              $region132: #{deconv_block_forward.1} parent=127 // loop_body
                %v419 = vld [vmem:[%s417] sm:%s410]
                %420 = vst [vmem:[%s418] sm:%s410] %v419
                %v421 = vld [vmem:[%s417 + $0x10] sm:%s410]
                %422 = vst [vmem:[%s418 + $0x8] sm:%s410] %v421
              $region133: #{deconv_block_forward.1} parent=127 // loop_footer
                %s416 = sadd.s32 1, %s412
              $region134: #{deconv_block_forward.1} parent=127 // loop_footer_branch
                %411 = sbr.rel target = $region130
              $region135: #{deconv_block_forward.1} parent=127 // loop_exit
                _
            $region128: #{deconv_block_forward.1} parent=119 // pred_fallthru
              _
          $region120: #{deconv_block_forward.1} parent=115 // pred_fallthru
            _
          %439 = vnop
        $region116: #{deconv_block_forward.1} parent=35 // pred_fallthru
          _
      $region36: #{deconv_block_forward.1} parent=5 // pred_fallthru
        _
      %p440 = scmp.le.s32.totalorder 1, %s15
      %p441 = scmp.lt.s32.totalorder %s15, 5
      %p442 = pnand %p440, %p441
      %p443 = pneg %p442
      // Predicated region
      $region151: #{deconv_block_forward.1} parent=5 // pred_check
        _
      $region152: #{deconv_block_forward.1} parent=5 // pred_check_branch
        %445 = sbr.rel (%p442) target = $region154
      $region153: #{deconv_block_forward.1} parent=5 // pred_region
        %s446 = ssub.s32 %s15, 1
        %s447 = sand.u32 %s42, 1
        %s448 = sand.u32 %s42, 1
        %s449 = smul.addr %s448, 16
        %s450 = scalar_lea.vmem [#allocation4], %s449
        // Predicated region
        $region155: #{deconv_block_forward.1} parent=153 // pred_check
          %p451 = pneg %p55
        $region156: #{deconv_block_forward.1} parent=153 // pred_check_branch
          %453 = sbr.rel (%p451) target = $region158
        $region157: #{deconv_block_forward.1} parent=153 // pred_region
          _
        $region158: #{deconv_block_forward.1} parent=153 // pred_fallthru
          _
        %s454 = sand.u32 %s76, 1
        %s455 = sand.u32 %s76, 1
        %s456 = smul.addr %s455, 16
        %s457 = scalar_lea.vmem [#allocation5], %s456
        // Predicated region
        $region159: #{deconv_block_forward.1} parent=153 // pred_check
          %p458 = pneg %p89
        $region160: #{deconv_block_forward.1} parent=153 // pred_check_branch
          %460 = sbr.rel (%p458) target = $region162
        $region161: #{deconv_block_forward.1} parent=153 // pred_region
          _
        $region162: #{deconv_block_forward.1} parent=153 // pred_fallthru
          _
        %s461 = sand.u32 %s110, 1
        %s462 = sand.u32 %s110, 1
        %s463 = smul.addr %s462, 16
        %s464 = scalar_lea.vmem [#allocation6], %s463
        // Predicated region
        $region163: #{deconv_block_forward.1} parent=153 // pred_check
          %p465 = pneg %p123
        $region164: #{deconv_block_forward.1} parent=153 // pred_check_branch
          %467 = sbr.rel (%p465) target = $region166
        $region165: #{deconv_block_forward.1} parent=153 // pred_region
          _
        $region166: #{deconv_block_forward.1} parent=153 // pred_fallthru
          _
        %s468 = sand.u32 %s42, 1
        %s469 = sand.u32 %s42, 1
        %s470 = smul.addr %s469, 16
        %s471 = scalar_lea.vmem [#allocation4], %s470
        %p472 = pneg %p55
        %p473 = pneg %p52
        %s474 = sand.u32 %s76, 1
        %s475 = sand.u32 %s76, 1
        %s476 = smul.addr %s475, 16
        %s477 = scalar_lea.vmem [#allocation5], %s476
        %p478 = pneg %p89
        %p479 = pneg %p86
        %s480 = sand.u32 %s110, 1
        %s481 = sand.u32 %s110, 1
        %s482 = smul.addr %s481, 16
        %s483 = scalar_lea.vmem [#allocation6], %s482
        %p484 = pneg %p123
        %p485 = pneg %p120
        %p486 = pneg %p144
        %p487 = pneg %p141
        %p488 = pneg %p165
        %p489 = pneg %p162
        %p490 = pneg %p186
        %p491 = pneg %p183
        %p492 = pneg %p207
        %p493 = pneg %p204
        %p494 = pneg %p228
        %p495 = pneg %p225
        %p496 = pneg %p256
        %p497 = pneg %p253
        %s498 = sand.u32 %s243, 1
        %s499 = sand.u32 %s243, 1
        %s500 = smul.addr %s499, 8
        %s501 = scalar_lea.vmem [#allocation7], %s500
        %s502 = ssub.s32 %s25, 1
        %p503 = scmp.gt.s32.totalorder %s502, 0
        %s504 = scalar_select %p503, %s502, 0
        %s505 = sadd.s32 %s25, 1
        %p506 = scmp.lt.s32.totalorder %s505, 1
        %s507 = scalar_select %p506, %s505, 1
        %p511 = scmp.eq.s32.totalorder %s25, 0
        %p512 = scmp.eq.s32.totalorder %s25, 1
        %v513 = vld [vmem:[%s457] sm:$0xff]
        %v514 = vld [vmem:[%s457 + $0x8] sm:$0xff]
        %s515 = scalar_select %p511, 1, 0
        %v516 = vstv %s515
        %vm517 = vcmp.eq.s32.totalorder %v516, 1
        %v518 = vsel %vm517, 0.0, %v513
        %v519 = vsel %vm517, 0.0, %v514
        %v520 = vld [vmem:[%s464] sm:$0xff]
        %v521 = vld [vmem:[%s464 + $0x8] sm:$0xff]
        %s522 = scalar_select %p512, 1, 0
        %v523 = vstv %s522
        %vm524 = vcmp.eq.s32.totalorder %v523, 1
        %v525 = vsel %vm524, 0.0, %v520
        %v526 = vsel %vm524, 0.0, %v521
        %vm527 = vcmask 3072
        %528 = vst.msk [vmem:[#allocation2] sm:$0xf] %vm527, 0
        %529 = vst.msk [vmem:[#allocation2 + $0x8] sm:$0xf] %vm527, 0
        %v530 = vpack.c.bf16 %v519, %v518
        %v532 = vunpack.c.l.b16 %v530
        %v533 = vunpack.c.h.b16 %v530
        %v534 = vpack.c.b16 %v532, %v532
        %v535 = vpack.c.b16 %v533, %v533
        %536 = vrot.lane.b32.xlu0 %v534, 17
        %v537 = vpop.permute.xlu0 %536
        %538 = vrot.lane.b32.xlu0 %v535, 17
        %v539 = vpop.permute.xlu0 %538
        %vm542 = vcmask 134152
        %543 = vst.msk [vmem:[#allocation2] sm:$0xf] %vm542, %v537
        %544 = vst.msk [vmem:[#allocation2 + $0x8] sm:$0xf] %vm542, %v539
        %v545 = vld [vmem:[%s450] sm:$0xff]
        %v546 = vld [vmem:[%s450 + $0x8] sm:$0xff]
        %v547 = vpack.c.bf16 %v546, %v545
        %v549 = vunpack.c.l.b16 %v547
        %v550 = vunpack.c.h.b16 %v547
        %v551 = vpack.c.b16 %v549, %v549
        %v552 = vpack.c.b16 %v550, %v550
        %553 = vrot.lane.b32.xlu0 %v551, 17
        %v554 = vpop.permute.xlu0 %553
        %555 = vrot.lane.b32.xlu0 %v552, 17
        %v556 = vpop.permute.xlu0 %555
        %v557 = vrot.slane %v554, 4
        %v558 = vrot.slane %v556, 4
        %vm559 = vcmask 138240
        %v560 = vsel %vm559, %v557, %v554
        %v561 = vsel %vm559, %v558, %v556
        %vm564 = vcmask 1043592
        %vm565 = vcmask 138244
        %vm566 = vmor %vm565, %vm564
        %567 = vst.msk [vmem:[#allocation2] sm:$0xff] %vm566, %v560
        %568 = vst.msk [vmem:[#allocation2 + $0x8] sm:$0xff] %vm566, %v561
        %v569 = vpack.c.bf16 %v526, %v525
        %v571 = vunpack.c.l.b16 %v569
        %v572 = vunpack.c.h.b16 %v569
        %v573 = vpack.c.b16 %v571, %v571
        %v574 = vpack.c.b16 %v572, %v572
        %575 = vrot.lane.b32.xlu0 %v573, 17
        %v576 = vpop.permute.xlu0 %575
        %577 = vrot.lane.b32.xlu0 %v574, 17
        %v578 = vpop.permute.xlu0 %577
        %vm581 = vcmask 265352
        %582 = vst.msk [vmem:[#allocation2 + $0x4] sm:$0xf] %vm581, %v576
        %583 = vst.msk [vmem:[#allocation2 + $0xc] sm:$0xf] %vm581, %v578
        %vm584 = vcmask 273672
        %585 = vst.msk [vmem:[#allocation2 + $0x4] sm:$0xf] %vm584, 0
        %586 = vst.msk [vmem:[#allocation2 + $0xc] sm:$0xf] %vm584, 0
        %v587 = vlaneseq
        %v588 = vand.u32 %v587, 127
        %vm589 = vcmp.lt.s32.totalorder %v588, 0
        %v590 = vsub.s32 0, %v588
        %v591 = vsel %vm589, %v590, %v588
        %v592 = vshrl.u32 %v591, 4
        %v593 = vand.u32 %v591, 15
        %v594 = vsub.s32 0, %v593
        %v595 = vsel %vm589, %v594, %v593
        %vm596 = vcmp.ne.s32.totalorder %v595, 0
        %vm597 = vcmp.lt.s32.totalorder %v595, 0
        %vm598 = vmand %vm597, %vm596
        %v599 = vadd.s32 %v595, 16
        %v600 = vsel %vm598, %v599, %v595
        %vm601 = vcmp.ne.s32.totalorder %v600, 0
        %vm602 = vcmp.ne.s32.totalorder %v600, 15
        %v603 = vld [vmem:[#allocation2] sm:$0xf]
        %v604 = vld [vmem:[#allocation2 + $0x8] sm:$0xf]
        %v605 = vsel %vm601, 1, 0
        %vm606 = vcmp.eq.s32.totalorder %v605, 1
        %vm607 = vmpackc.low %vm606, %vm606
        %v608 = vsel %vm607, %v603, 0
        %v609 = vsel %vm607, %v604, 0
        %v610 = vld [vmem:[#allocation2] sm:$0xff]
        %v611 = vld [vmem:[#allocation2 + $0x8] sm:$0xff]
        %v612 = vsel %vm602, 1, 0
        %vm613 = vcmp.eq.s32.totalorder %v612, 1
        %vm614 = vmpackc.low %vm613, %vm613
        %v615 = vsel %vm614, 65537, 0
        %616 = vrot.lane.b32.xlu0 %v615, 2
        %v617 = vpop.permute.xlu0 %616
        %v618 = vrot.slane %v617, 4
        %vm619 = vcmask 15360
        %v620 = vsel %vm619, %v618, %v617
        %vm621 = vcmp.ne.s16.totalorder %v620, 0
        %v622 = vsel %vm621, %v610, 0
        %v623 = vsel %vm621, %v611, 0
        %v624 = vsel %vm607, 65537, 0
        %625 = vrot.lane.b32.xlu0 %v624, 16
        %v626 = vpop.permute.xlu0 %625
        %v627 = vrot.slane %v626, 4
        %vm628 = vcmask 130048
        %v629 = vsel %vm628, %v627, %v626
        %vm630 = vcmp.ne.s16.totalorder %v629, 0
        %v631 = vsel %vm630, %v610, 0
        %v632 = vsel %vm630, %v611, 0
        %633 = vrot.lane.b32.xlu0 %v615, 18
        %v634 = vpop.permute.xlu0 %633
        %v635 = vrot.slane %v634, 4
        %vm636 = vcmask 146432
        %v637 = vsel %vm636, %v635, %v634
        %vm638 = vcmp.ne.s16.totalorder %v637, 0
        %v639 = vsel %vm638, %v610, 0
        %v640 = vsel %vm638, %v611, 0
        %641 = vrot.lane.b32.xlu0 %v624, 32
        %v642 = vpop.permute.xlu0 %641
        %v643 = vrot.slane %v642, 4
        %vm644 = vcmask 261120
        %v645 = vsel %vm644, %v643, %v642
        %vm646 = vcmp.ne.s16.totalorder %v645, 0
        %v647 = vsel %vm646, %v610, 0
        %v648 = vsel %vm646, %v611, 0
        %649 = vrot.lane.b32.xlu0 %v615, 34
        %v650 = vpop.permute.xlu0 %649
        %v651 = vrot.slane %v650, 4
        %vm652 = vcmask 277504
        %v653 = vsel %vm652, %v651, %v650
        %vm654 = vcmp.ne.s16.totalorder %v653, 0
        %v655 = vsel %vm654, %v610, 0
        %v656 = vsel %vm654, %v611, 0
        %v657 = vld [vmem:[%s3] sm:$0xf]
        %v658 = vld [vmem:[%s3 + $0x4] sm:$0xf]
        %v661 = vunpack.c.l.b16 %v608
        %v662 = vunpack.c.l.b16 %v609
        %v663 = vpack.c.b16 %v662, %v661
        %v667 = vunpack.c.l.b16 %v610
        %v668 = vunpack.c.h.b16 %v610
        %v669 = vunpack.c.l.b16 %v611
        %v670 = vunpack.c.h.b16 %v611
        %v671 = vpack.c.b16 %v669, %v667
        %v672 = vpack.c.b16 %v670, %v668
        %673 = vrot.lane.b32.xlu0 %v671, 127
        %v674 = vpop.permute.xlu0 %673
        %675 = vrot.lane.b32.xlu0 %v672, 127
        %v676 = vpop.permute.xlu0 %675
        %vm677 = vcmask 1039360
        %v678 = vsel %vm677, %v674, %v676
        %v682 = vunpack.c.l.b16 %v622
        %v683 = vunpack.c.h.b16 %v622
        %v684 = vunpack.c.l.b16 %v623
        %v685 = vunpack.c.h.b16 %v623
        %v686 = vpack.c.b16 %v684, %v682
        %v687 = vpack.c.b16 %v685, %v683
        %v690 = vunpack.c.l.b16 %v631
        %v691 = vunpack.c.h.b16 %v631
        %v692 = vunpack.c.l.b16 %v632
        %v693 = vunpack.c.h.b16 %v632
        %v694 = vpack.c.b16 %v692, %v690
        %v695 = vpack.c.b16 %v693, %v691
        %696 = vrot.lane.b32.xlu0 %v694, 114
        %v697 = vpop.permute.xlu0 %696
        %698 = vrot.lane.b32.xlu0 %v695, 114
        %v699 = vpop.permute.xlu0 %698
        %vm700 = vcmask 932864
        %v701 = vsel %vm700, %v697, %v699
        %s702 = scalar_lea.vmem %s3, 8
        %v703 = vld [vmem:[%s702] sm:$0xf]
        %v704 = vld [vmem:[%s702 + $0x4] sm:$0xf]
        %v707 = vunpack.c.l.b16 %v703
        %v708 = vunpack.c.l.b16 %v704
        %v709 = vpack.c.b16 %v708, %v707
        %710 = vrot.lane.b32.xlu0 %v686, 126
        %v711 = vpop.permute.xlu0 %710
        %712 = vrot.lane.b32.xlu0 %v687, 126
        %v713 = vpop.permute.xlu0 %712
        %714 = vrot.lane.b32.xlu0 %v701, 126
        %v715 = vpop.permute.xlu0 %714
        %716 = vrot.lane.b32.xlu0 %v699, 126
        %v717 = vpop.permute.xlu0 %716
        %vm718 = vcmask 1031168
        %v719 = vsel %vm718, %v711, %v713
        %v720 = vsel %vm718, %v715, %v717
        %vm723 = vcmask 261120
        %v725 = vsel %vm723, %v709, 0
        %727 = vmatprep.subr.bf16.mxu0 0
        %728 = vmatpush1.bf16.msra.mxu0 0
        %729 = vmatprep.subr.bf16.mxu0 0
        %730 = vmatpush1.bf16.msra.mxu0 0
        %731 = vmatprep.subr.bf16.mxu0 0
        %732 = vmatpush1.bf16.msra.mxu0 0
        %733 = vmatprep.subr.bf16.mxu0 0
        %734 = vmatpush1.bf16.msra.mxu0 0
        %735 = vmatprep.subr.bf16.mxu0 0
        %736 = vmatpush1.bf16.msra.mxu0 0
        %737 = vmatprep.subr.bf16.mxu0 0
        %738 = vmatpush1.bf16.msra.mxu0 0
        %739 = vmatprep.subr.bf16.mxu0 0
        %740 = vmatpush1.bf16.msra.mxu0 %v720
        %741 = vmatprep.subr.bf16.mxu0 0
        %742 = vmatpush1.bf16.msra.mxu0 %v719
        %743 = vmatprep.subr.bf16.mxu0 0
        %744 = vmatpush2.bf16.msra.mxu0 0
        %745 = vmatprep.subr.bf16.mxu0 0
        %746 = vmatpush2.bf16.msra.mxu0 0
        %747 = vmatprep.subr.bf16.mxu0 0
        %748 = vmatpush2.bf16.msra.mxu0 0
        %749 = vmatprep.subr.bf16.mxu0 0
        %750 = vmatpush2.bf16.msra.mxu0 0
        %751 = vmatprep.subr.bf16.mxu0 0
        %752 = vmatpush2.bf16.msra.mxu0 0
        %753 = vmatprep.subr.bf16.mxu0 0
        %754 = vmatpush2.bf16.msra.mxu0 0
        %755 = vmatprep.subr.bf16.mxu0 0
        %756 = vmatpush2.bf16.msra.mxu0 0
        %757 = vmatprep.subr.bf16.mxu0 0
        %758 = vmatpush2.bf16.msra.mxu0 0
        %759 = vmatprep.mubr.bf16.mxu0 0
        %760 = vmatmul.mubr.bf16.gmra.mxu0 %v725
        %v761 = vpop.f32.mrf.mxu0
        %v762 = vadd.f32 0.0, %v761
        %v763 = vpop.f32.mrf.mxu0
        %v764 = vpop.f32.mrf.mxu0
        %v765 = vadd.f32 0.0, %v764
        %v766 = vpop.f32.mrf.mxu0
        %767 = vdwg.mxu0
        %v770 = vunpack.c.l.b16 %v657
        %v771 = vunpack.c.l.b16 %v658
        %v772 = vpack.c.b16 %v771, %v770
        %v774 = vsel %vm723, %v772, 0
        %776 = vmatprep.subr.bf16.mxu0 0
        %777 = vmatpush1.bf16.msra.mxu0 0
        %778 = vmatprep.subr.bf16.mxu0 0
        %779 = vmatpush1.bf16.msra.mxu0 0
        %780 = vmatprep.subr.bf16.mxu0 0
        %781 = vmatpush1.bf16.msra.mxu0 0
        %782 = vmatprep.subr.bf16.mxu0 0
        %783 = vmatpush1.bf16.msra.mxu0 0
        %784 = vmatprep.subr.bf16.mxu0 0
        %785 = vmatpush1.bf16.msra.mxu0 0
        %786 = vmatprep.subr.bf16.mxu0 0
        %787 = vmatpush1.bf16.msra.mxu0 0
        %788 = vmatprep.subr.bf16.mxu0 0
        %789 = vmatpush1.bf16.msra.mxu0 %v678
        %790 = vmatprep.subr.bf16.mxu0 0
        %791 = vmatpush1.bf16.msra.mxu0 %v663
        %792 = vmatprep.subr.bf16.mxu0 0
        %793 = vmatpush2.bf16.msra.mxu0 0
        %794 = vmatprep.subr.bf16.mxu0 0
        %795 = vmatpush2.bf16.msra.mxu0 0
        %796 = vmatprep.subr.bf16.mxu0 0
        %797 = vmatpush2.bf16.msra.mxu0 0
        %798 = vmatprep.subr.bf16.mxu0 0
        %799 = vmatpush2.bf16.msra.mxu0 0
        %800 = vmatprep.subr.bf16.mxu0 0
        %801 = vmatpush2.bf16.msra.mxu0 0
        %802 = vmatprep.subr.bf16.mxu0 0
        %803 = vmatpush2.bf16.msra.mxu0 0
        %804 = vmatprep.subr.bf16.mxu0 0
        %805 = vmatpush2.bf16.msra.mxu0 0
        %806 = vmatprep.subr.bf16.mxu0 0
        %807 = vmatpush2.bf16.msra.mxu0 0
        %808 = vmatprep.mubr.bf16.mxu0 0
        %809 = vmatmul.mubr.bf16.gmra.mxu0 %v774
        %v810 = vpop.f32.mrf.mxu0
        %v811 = vadd.f32 %v762, %v810
        %v812 = vpop.f32.mrf.mxu0
        %v813 = vpop.f32.mrf.mxu0
        %v814 = vadd.f32 %v765, %v813
        %v815 = vpop.f32.mrf.mxu0
        %816 = vdwg.mxu0
        %v819 = vunpack.c.l.b16 %v639
        %v820 = vunpack.c.h.b16 %v639
        %v821 = vunpack.c.l.b16 %v640
        %v822 = vunpack.c.h.b16 %v640
        %v823 = vpack.c.b16 %v821, %v819
        %v824 = vpack.c.b16 %v822, %v820
        %825 = vrot.lane.b32.xlu0 %v823, 127
        %v826 = vpop.permute.xlu0 %825
        %827 = vrot.lane.b32.xlu0 %v824, 127
        %v828 = vpop.permute.xlu0 %827
        %v829 = vsel %vm677, %v826, %v828
        %s830 = scalar_lea.vmem %s3, 16
        %v831 = vld [vmem:[%s830] sm:$0xf]
        %v832 = vld [vmem:[%s830 + $0x4] sm:$0xf]
        %v835 = vunpack.c.l.b16 %v831
        %v836 = vunpack.c.l.b16 %v832
        %v837 = vpack.c.b16 %v836, %v835
        %838 = vrot.lane.b32.xlu0 %v671, 111
        %v839 = vpop.permute.xlu0 %838
        %840 = vrot.lane.b32.xlu0 %v672, 111
        %v841 = vpop.permute.xlu0 %840
        %842 = vrot.lane.b32.xlu0 %v829, 111
        %v843 = vpop.permute.xlu0 %842
        %844 = vrot.lane.b32.xlu0 %v828, 111
        %v845 = vpop.permute.xlu0 %844
        %vm846 = vcmask 908288
        %v847 = vsel %vm846, %v839, %v841
        %v848 = vsel %vm846, %v843, %v845
        %v852 = vsel %vm723, %v837, 0
        %854 = vmatprep.subr.bf16.mxu0 0
        %855 = vmatpush1.bf16.msra.mxu0 0
        %856 = vmatprep.subr.bf16.mxu0 0
        %857 = vmatpush1.bf16.msra.mxu0 0
        %858 = vmatprep.subr.bf16.mxu0 0
        %859 = vmatpush1.bf16.msra.mxu0 0
        %860 = vmatprep.subr.bf16.mxu0 0
        %861 = vmatpush1.bf16.msra.mxu0 0
        %862 = vmatprep.subr.bf16.mxu0 0
        %863 = vmatpush1.bf16.msra.mxu0 0
        %864 = vmatprep.subr.bf16.mxu0 0
        %865 = vmatpush1.bf16.msra.mxu0 0
        %866 = vmatprep.subr.bf16.mxu0 0
        %867 = vmatpush1.bf16.msra.mxu0 %v848
        %868 = vmatprep.subr.bf16.mxu0 0
        %869 = vmatpush1.bf16.msra.mxu0 %v847
        %870 = vmatprep.subr.bf16.mxu0 0
        %871 = vmatpush2.bf16.msra.mxu0 0
        %872 = vmatprep.subr.bf16.mxu0 0
        %873 = vmatpush2.bf16.msra.mxu0 0
        %874 = vmatprep.subr.bf16.mxu0 0
        %875 = vmatpush2.bf16.msra.mxu0 0
        %876 = vmatprep.subr.bf16.mxu0 0
        %877 = vmatpush2.bf16.msra.mxu0 0
        %878 = vmatprep.subr.bf16.mxu0 0
        %879 = vmatpush2.bf16.msra.mxu0 0
        %880 = vmatprep.subr.bf16.mxu0 0
        %881 = vmatpush2.bf16.msra.mxu0 0
        %882 = vmatprep.subr.bf16.mxu0 0
        %883 = vmatpush2.bf16.msra.mxu0 0
        %884 = vmatprep.subr.bf16.mxu0 0
        %885 = vmatpush2.bf16.msra.mxu0 0
        %886 = vmatprep.mubr.bf16.mxu0 0
        %887 = vmatmul.mubr.bf16.gmra.mxu0 %v852
        %v888 = vpop.f32.mrf.mxu0
        %v889 = vadd.f32 0.0, %v888
        %v890 = vpop.f32.mrf.mxu0
        %v891 = vpop.f32.mrf.mxu0
        %v892 = vadd.f32 0.0, %v891
        %v893 = vpop.f32.mrf.mxu0
        %894 = vdwg.mxu0
        %v895 = vadd.f32 %v811, %v889
        %v896 = vadd.f32 %v814, %v892
        %v899 = vunpack.c.l.b16 %v647
        %v900 = vunpack.c.h.b16 %v647
        %v901 = vunpack.c.l.b16 %v648
        %v902 = vunpack.c.h.b16 %v648
        %v903 = vpack.c.b16 %v901, %v899
        %v904 = vpack.c.b16 %v902, %v900
        %s905 = scalar_lea.vmem %s3, 24
        %v906 = vld [vmem:[%s905] sm:$0xf]
        %v907 = vld [vmem:[%s905 + $0x4] sm:$0xf]
        %v910 = vunpack.c.l.b16 %v906
        %v911 = vunpack.c.l.b16 %v907
        %v912 = vpack.c.b16 %v911, %v910
        %913 = vrot.lane.b32.xlu0 %v903, 96
        %v914 = vpop.permute.xlu0 %913
        %915 = vrot.lane.b32.xlu0 %v904, 96
        %v916 = vpop.permute.xlu0 %915
        %917 = vrot.lane.b32.xlu0 %v678, 96
        %v918 = vpop.permute.xlu0 %917
        %919 = vrot.lane.b32.xlu0 %v676, 96
        %v920 = vpop.permute.xlu0 %919
        %vm921 = vcmask 785408
        %v922 = vsel %vm921, %v914, %v916
        %v923 = vsel %vm921, %v918, %v920
        %v927 = vsel %vm723, %v912, 0
        %929 = vmatprep.subr.bf16.mxu0 0
        %930 = vmatpush1.bf16.msra.mxu0 0
        %931 = vmatprep.subr.bf16.mxu0 0
        %932 = vmatpush1.bf16.msra.mxu0 0
        %933 = vmatprep.subr.bf16.mxu0 0
        %934 = vmatpush1.bf16.msra.mxu0 0
        %935 = vmatprep.subr.bf16.mxu0 0
        %936 = vmatpush1.bf16.msra.mxu0 0
        %937 = vmatprep.subr.bf16.mxu0 0
        %938 = vmatpush1.bf16.msra.mxu0 0
        %939 = vmatprep.subr.bf16.mxu0 0
        %940 = vmatpush1.bf16.msra.mxu0 0
        %941 = vmatprep.subr.bf16.mxu0 0
        %942 = vmatpush1.bf16.msra.mxu0 %v923
        %943 = vmatprep.subr.bf16.mxu0 0
        %944 = vmatpush1.bf16.msra.mxu0 %v922
        %945 = vmatprep.subr.bf16.mxu0 0
        %946 = vmatpush2.bf16.msra.mxu0 0
        %947 = vmatprep.subr.bf16.mxu0 0
        %948 = vmatpush2.bf16.msra.mxu0 0
        %949 = vmatprep.subr.bf16.mxu0 0
        %950 = vmatpush2.bf16.msra.mxu0 0
        %951 = vmatprep.subr.bf16.mxu0 0
        %952 = vmatpush2.bf16.msra.mxu0 0
        %953 = vmatprep.subr.bf16.mxu0 0
        %954 = vmatpush2.bf16.msra.mxu0 0
        %955 = vmatprep.subr.bf16.mxu0 0
        %956 = vmatpush2.bf16.msra.mxu0 0
        %957 = vmatprep.subr.bf16.mxu0 0
        %958 = vmatpush2.bf16.msra.mxu0 0
        %959 = vmatprep.subr.bf16.mxu0 0
        %960 = vmatpush2.bf16.msra.mxu0 0
        %961 = vmatprep.mubr.bf16.mxu0 0
        %962 = vmatmul.mubr.bf16.gmra.mxu0 %v927
        %v963 = vpop.f32.mrf.mxu0
        %v964 = vadd.f32 0.0, %v963
        %v965 = vpop.f32.mrf.mxu0
        %v966 = vpop.f32.mrf.mxu0
        %v967 = vadd.f32 0.0, %v966
        %v968 = vpop.f32.mrf.mxu0
        %969 = vdwg.mxu0
        %v970 = vadd.f32 %v895, %v964
        %v971 = vadd.f32 %v896, %v967
        %v972 = vld [vmem:[%s4] sm:$0xf]
        %v973 = vld [vmem:[%s4 + $0x4] sm:$0xf]
        %v976 = vunpack.c.l.b16 %v972
        %v977 = vunpack.c.l.b16 %v973
        %v978 = vpack.c.b16 %v977, %v976
        %v981 = vunpack.c.l.b16 %v655
        %v982 = vunpack.c.h.b16 %v655
        %v983 = vunpack.c.l.b16 %v656
        %v984 = vunpack.c.h.b16 %v656
        %v985 = vpack.c.b16 %v983, %v981
        %v986 = vpack.c.b16 %v984, %v982
        %987 = vrot.lane.b32.xlu0 %v985, 94
        %v988 = vpop.permute.xlu0 %987
        %989 = vrot.lane.b32.xlu0 %v986, 94
        %v990 = vpop.permute.xlu0 %989
        %vm991 = vcmask 769024
        %v992 = vsel %vm991, %v988, %v990
        %vm994 = vcmask 130048
        %v996 = vsel %vm994, %v978, 0
        %998 = vmatprep.subr.bf16.mxu0 0
        %999 = vmatpush1.bf16.msra.mxu0 0
        %1000 = vmatprep.subr.bf16.mxu0 0
        %1001 = vmatpush1.bf16.msra.mxu0 0
        %1002 = vmatprep.subr.bf16.mxu0 0
        %1003 = vmatpush1.bf16.msra.mxu0 0
        %1004 = vmatprep.subr.bf16.mxu0 0
        %1005 = vmatpush1.bf16.msra.mxu0 0
        %1006 = vmatprep.subr.bf16.mxu0 0
        %1007 = vmatpush1.bf16.msra.mxu0 0
        %1008 = vmatprep.subr.bf16.mxu0 0
        %1009 = vmatpush1.bf16.msra.mxu0 0
        %1010 = vmatprep.subr.bf16.mxu0 0
        %1011 = vmatpush1.bf16.msra.mxu0 0
        %1012 = vmatprep.subr.bf16.mxu0 0
        %1013 = vmatpush1.bf16.msra.mxu0 %v992
        %1014 = vmatprep.subr.bf16.mxu0 0
        %1015 = vmatpush2.bf16.msra.mxu0 0
        %1016 = vmatprep.subr.bf16.mxu0 0
        %1017 = vmatpush2.bf16.msra.mxu0 0
        %1018 = vmatprep.subr.bf16.mxu0 0
        %1019 = vmatpush2.bf16.msra.mxu0 0
        %1020 = vmatprep.subr.bf16.mxu0 0
        %1021 = vmatpush2.bf16.msra.mxu0 0
        %1022 = vmatprep.subr.bf16.mxu0 0
        %1023 = vmatpush2.bf16.msra.mxu0 0
        %1024 = vmatprep.subr.bf16.mxu0 0
        %1025 = vmatpush2.bf16.msra.mxu0 0
        %1026 = vmatprep.subr.bf16.mxu0 0
        %1027 = vmatpush2.bf16.msra.mxu0 0
        %1028 = vmatprep.subr.bf16.mxu0 0
        %1029 = vmatpush2.bf16.msra.mxu0 0
        %1030 = vmatprep.mubr.bf16.mxu0 0
        %1031 = vmatmul.mubr.bf16.gmra.mxu0 %v996
        %v1032 = vpop.f32.mrf.mxu0
        %v1033 = vadd.f32 0.0, %v1032
        %v1034 = vpop.f32.mrf.mxu0
        %v1035 = vpop.f32.mrf.mxu0
        %v1036 = vadd.f32 0.0, %v1035
        %v1037 = vpop.f32.mrf.mxu0
        %1038 = vdwg.mxu0
        %v1039 = vadd.f32 %v970, %v1033
        %v1040 = vadd.f32 %v971, %v1036
        %v1041 = vld [vmem:[%s6] sm:$0xff]
        %v1042 = vld [vmem:[%s6 + $0x8] sm:$0xff]
        %v1043 = vld [vmem:[%s5] sm:$0xf]
        %v1044 = vld [vmem:[%s5 + $0x4] sm:$0xf]
        %v1045 = vmul.f32 %v1039, %v1039
        %v1046 = vmul.f32 %v1040, %v1040
        %v1047 = vpack.c.bf16 %v1046, %v1045
        %v1050 = vunpack.c.l.b16 %v1043
        %v1051 = vunpack.c.l.b16 %v1044
        %v1052 = vpack.c.b16 %v1051, %v1050
        %v1054 = vsel %vm994, %v1052, 0
        %1056 = vmatprep.subr.bf16.mxu0 0
        %1057 = vmatpush1.bf16.msra.mxu0 0
        %1058 = vmatprep.subr.bf16.mxu0 0
        %1059 = vmatpush1.bf16.msra.mxu0 0
        %1060 = vmatprep.subr.bf16.mxu0 0
        %1061 = vmatpush1.bf16.msra.mxu0 0
        %1062 = vmatprep.subr.bf16.mxu0 0
        %1063 = vmatpush1.bf16.msra.mxu0 0
        %1064 = vmatprep.subr.bf16.mxu0 0
        %1065 = vmatpush1.bf16.msra.mxu0 0
        %1066 = vmatprep.subr.bf16.mxu0 0
        %1067 = vmatpush1.bf16.msra.mxu0 0
        %1068 = vmatprep.subr.bf16.mxu0 0
        %1069 = vmatpush1.bf16.msra.mxu0 0
        %1070 = vmatprep.subr.bf16.mxu0 0
        %1071 = vmatpush1.bf16.msra.mxu0 %v1047
        %1072 = vmatprep.subr.bf16.mxu0 0
        %1073 = vmatpush2.bf16.msra.mxu0 0
        %1074 = vmatprep.subr.bf16.mxu0 0
        %1075 = vmatpush2.bf16.msra.mxu0 0
        %1076 = vmatprep.subr.bf16.mxu0 0
        %1077 = vmatpush2.bf16.msra.mxu0 0
        %1078 = vmatprep.subr.bf16.mxu0 0
        %1079 = vmatpush2.bf16.msra.mxu0 0
        %1080 = vmatprep.subr.bf16.mxu0 0
        %1081 = vmatpush2.bf16.msra.mxu0 0
        %1082 = vmatprep.subr.bf16.mxu0 0
        %1083 = vmatpush2.bf16.msra.mxu0 0
        %1084 = vmatprep.subr.bf16.mxu0 0
        %1085 = vmatpush2.bf16.msra.mxu0 0
        %1086 = vmatprep.subr.bf16.mxu0 0
        %1087 = vmatpush2.bf16.msra.mxu0 0
        %1088 = vmatprep.mubr.bf16.mxu0 0
        %1089 = vmatmul.mubr.bf16.gmra.mxu0 %v1054
        %v1090 = vpop.f32.mrf.mxu0
        %v1091 = vadd.f32 0.0, %v1090
        %v1092 = vpop.f32.mrf.mxu0
        %v1093 = vpop.f32.mrf.mxu0
        %v1094 = vadd.f32 0.0, %v1093
        %v1095 = vpop.f32.mrf.mxu0
        %1096 = vdwg.mxu0
        %1098 = vset.pattern.permute.xlu0 0
        %1099 = vperm.xlu0 %1098, %v1041
        %v1100 = vpop.permute.xlu0 %1099
        %1103 = vset.pattern.permute.xlu0 0
        %1104 = vperm.xlu0 %1103, %v1042
        %v1105 = vpop.permute.xlu0 %1104
        %v1107 = vadd.f32 %v1100, %v1091
        %v1108 = vadd.f32 %v1105, %v1094
        %v1109 = vmax.f32 %v1107, 1e-09
        %v1110 = vmax.f32 %v1108, 1e-09
        %v1111 = vrsqrt.pop %v1109
        %v1112 = vrsqrt.pop %v1110
        %v1113 = vmul.f32 %v1039, %v1111
        %v1114 = vmul.f32 %v1040, %v1112
        %s1115 = sld [smem:[#allocation3]]
        %vm1116 = vcmp.gt.f32.partialorder %v1113, 0.0
        %vm1117 = vcmp.gt.f32.partialorder %v1114, 0.0
        %v1118 = vstv %s1115
        %v1119 = vmul.f32 %v1118, %v1113
        %v1120 = vmul.f32 %v1118, %v1114
        %v1121 = vsel %vm1116, %v1113, %v1119
        %v1122 = vsel %vm1117, %v1114, %v1120
        %v1123 = vpack.c.bf16 %v1122, %v1121
        %v1125 = vunpack.c.l.b16 %v1123
        %v1126 = vunpack.c.h.b16 %v1123
        %v1127 = vpack.c.b16 %v1125, %v1125
        %v1128 = vpack.c.b16 %v1126, %v1126
        %1131 = vst [vmem:[%s501] sm:$0xf] %v1127
        %1132 = vst [vmem:[%s501 + $0x4] sm:$0xf] %v1128
        %s1133 = sand.u32 %s243, 1
        %s1134 = sand.u32 %s243, 1
        %s1135 = smul.addr %s1134, 8
        %s1136 = scalar_lea.vmem [#allocation7], %s1135
        // Predicated region
        $region167: #{deconv_block_forward.1} parent=153 // pred_check
          %p1137 = pneg %p253
        $region168: #{deconv_block_forward.1} parent=153 // pred_check_branch
          %1139 = sbr.rel (%p1137) target = $region170
        $region169: #{deconv_block_forward.1} parent=153 // pred_region
          %s1140 = smul.addr %s24, 4
          %s1141 = sadd.s32 %s25, %s1140
          %s1142 = smul.addr %s1141, 4
          %s1143 = scalar_lea.vmem %s8, %s1142
          // Predicated region
          $region171: #{deconv_block_forward.1} parent=169 // pred_check
            _
          $region172: #{deconv_block_forward.1} parent=169 // pred_check_branch
            %1145 = sbr.rel (0) target = $region174
          $region173: #{deconv_block_forward.1} parent=169 // pred_region
            // Predicated region
            $region175: #{deconv_block_forward.1} parent=173 // pred_check
              _
            $region176: #{deconv_block_forward.1} parent=173 // pred_check_branch
              %1147 = sbr.rel target = $region178
            $region177: #{deconv_block_forward.1} parent=173 // pred_region
              // Predicated region
              $region190: #{deconv_block_forward.1} parent=177 // pred_check
                _
              $region191: #{deconv_block_forward.1} parent=177 // pred_check_branch
                %1165 = sbr.rel (0) target = $region193
              $region192: #{deconv_block_forward.1} parent=177 // pred_region
                loop: start=0, step=1, limit=1
                $region194: #{deconv_block_forward.1} parent=192 // loop_pre_header
                  _
                $region195: #{deconv_block_forward.1} parent=192 // loop_header
                  %s1167 = sphi 0, %s1171
                  %p1168 = scmp.ge.s32.totalorder %s1167, 1
                  %s1172 = sphi %s1136, %s1136
                  %s1173 = sphi %s1143, %s1143
                $region196: #{deconv_block_forward.1} parent=192 // loop_header_branch
                  %1170 = sbr.rel (%p1168) target = $region200
                $region197: #{deconv_block_forward.1} parent=192 // loop_body
                  _
                $region198: #{deconv_block_forward.1} parent=192 // loop_footer
                  %s1171 = sadd.s32 1, %s1167
                $region199: #{deconv_block_forward.1} parent=192 // loop_footer_branch
                  %1166 = sbr.rel target = $region195
                $region200: #{deconv_block_forward.1} parent=192 // loop_exit
                  _
                %s1175 = ssub.s32 16, 1
                loop: start=0, step=1, limit=1
                $region201: #{deconv_block_forward.1} parent=192 // loop_pre_header
                  _
                $region202: #{deconv_block_forward.1} parent=192 // loop_header
                  %s1177 = sphi 0, %s1181
                  %p1178 = scmp.ge.s32.totalorder %s1177, 1
                  %s1182 = sphi %s1136, %s1136
                  %s1183 = sphi %s1143, %s1143
                $region203: #{deconv_block_forward.1} parent=192 // loop_header_branch
                  %1180 = sbr.rel (%p1178) target = $region207
                $region204: #{deconv_block_forward.1} parent=192 // loop_body
                  %v1184 = vld [vmem:[%s1182] sm:%s1175]
                  %1185 = vst [vmem:[%s1183] sm:%s1175] %v1184
                  %v1186 = vld [vmem:[%s1182 + $0x4] sm:%s1175]
                  %1187 = vst [vmem:[%s1183 + $0x8] sm:%s1175] %v1186
                $region205: #{deconv_block_forward.1} parent=192 // loop_footer
                  %s1181 = sadd.s32 1, %s1177
                $region206: #{deconv_block_forward.1} parent=192 // loop_footer_branch
                  %1176 = sbr.rel target = $region202
                $region207: #{deconv_block_forward.1} parent=192 // loop_exit
                  _
              $region193: #{deconv_block_forward.1} parent=177 // pred_fallthru
                _
            $region178: #{deconv_block_forward.1} parent=173 // pred_fallthru
              _
            // Predicated region
            $region179: #{deconv_block_forward.1} parent=173 // pred_check
              _
            $region180: #{deconv_block_forward.1} parent=173 // pred_check_branch
              %1149 = sbr.rel (0) target = $region182
            $region181: #{deconv_block_forward.1} parent=173 // pred_region
              %s1151 = ssub.s32 16, 1
              loop: start=0, step=1, limit=1
              $region183: #{deconv_block_forward.1} parent=181 // loop_pre_header
                _
              $region184: #{deconv_block_forward.1} parent=181 // loop_header
                %s1153 = sphi 0, %s1157
                %p1154 = scmp.ge.s32.totalorder %s1153, 1
                %s1158 = sphi %s1136, %s1136
                %s1159 = sphi %s1143, %s1143
              $region185: #{deconv_block_forward.1} parent=181 // loop_header_branch
                %1156 = sbr.rel (%p1154) target = $region189
              $region186: #{deconv_block_forward.1} parent=181 // loop_body
                %v1160 = vld [vmem:[%s1158] sm:%s1151]
                %1161 = vst [vmem:[%s1159] sm:%s1151] %v1160
                %v1162 = vld [vmem:[%s1158 + $0x4] sm:%s1151]
                %1163 = vst [vmem:[%s1159 + $0x8] sm:%s1151] %v1162
              $region187: #{deconv_block_forward.1} parent=181 // loop_footer
                %s1157 = sadd.s32 1, %s1153
              $region188: #{deconv_block_forward.1} parent=181 // loop_footer_branch
                %1152 = sbr.rel target = $region184
              $region189: #{deconv_block_forward.1} parent=181 // loop_exit
                _
            $region182: #{deconv_block_forward.1} parent=173 // pred_fallthru
              _
          $region174: #{deconv_block_forward.1} parent=169 // pred_fallthru
            _
          %1188 = vnop
        $region170: #{deconv_block_forward.1} parent=153 // pred_fallthru
          _
      $region154: #{deconv_block_forward.1} parent=5 // pred_fallthru
        _
      %p1189 = scmp.le.s32.totalorder 2, %s15
      // Predicated region
      $region208: #{deconv_block_forward.1} parent=5 // pred_check
        %p1190 = pneg %p1189
      $region209: #{deconv_block_forward.1} parent=5 // pred_check_branch
        %1192 = sbr.rel (%p1190) target = $region211
      $region210: #{deconv_block_forward.1} parent=5 // pred_region
        %s1193 = ssub.s32 %s15, 2
        // Predicated region
        $region212: #{deconv_block_forward.1} parent=210 // pred_check
          %p1194 = pneg %p259
        $region213: #{deconv_block_forward.1} parent=210 // pred_check_branch
          %1196 = sbr.rel (%p1194) target = $region215
        $region214: #{deconv_block_forward.1} parent=210 // pred_region
          %s1197 = sand.u32 %s244, 1
          %s1198 = sand.u32 %s244, 1
          %s1199 = smul.addr %s1198, 8
          %s1200 = scalar_lea.vmem [#allocation7], %s1199
        $region215: #{deconv_block_forward.1} parent=210 // pred_fallthru
          _
      $region211: #{deconv_block_forward.1} parent=5 // pred_fallthru
        _
    $region6: #{deconv_block_forward.1} parent=1 // loop_footer
      %s19 = sadd.s32 1, %s15
    $region7: #{deconv_block_forward.1} parent=1 // loop_footer_branch
      %14 = sbr.rel target = $region3
    $region8: #{deconv_block_forward.1} parent=1 // loop_exit
      _

</llo_original>
